<compile_context>
chip_gen: v7x
topology: tpu7x:2x2x1
jax: 0.10.0
libtpu: 0.0.40
codegen_flags: <defaults>
</compile_context>

<pallas_src>
import jax
import jax.numpy as jnp
from jax import lax
from jax.experimental import pallas as pl
from jax.experimental.pallas import tpu as pltpu

LRELU_SLOPE = 0.01      # nn.LeakyReLU default negative_slope
BN_EPS = 1e-5           # nn.BatchNorm1d default eps
L4_RAW = 1000           # width of the 4th linear layer in the PyTorch module
L4_PAD = 1024           # zero-padded to a multiple of 128 lanes
_NPH = 4                # phases: layer1, layer2, layer3, layer4+5/output


def _round_up(n, m):
    return (n + m - 1) // m * m


def _leaky_relu(v):
    return jnp.where(v >= 0, v, LRELU_SLOPE * v)


# ----------------------------- fused Pallas kernel -----------------------------

def _make_kernel(batch, batch_pad, tile_b):
    """batch: real batch size; batch_pad: zero-padded rows (multiple of tile_b)."""
    inv_n = 1.0 / batch

    def kernel(x_ref,
               w1_ref, g1_ref, be1_ref,
               w2_ref, g2_ref, be2_ref,
               w3_ref, g3_ref, be3_ref,
               w4_ref, b4_ref,
               w5_ref, b5_ref,
               o_ref,
               z_ref, sum_ref, sc_ref, sh_ref):
        p = pl.program_id(0)
        t = pl.program_id(1)
        nt = pl.num_programs(1)
        row0 = pl.multiple_of(t * tile_b, tile_b)
        rows = pl.ds(row0, tile_b)

        def matmul(h_bf16, w_ref):
            # bf16 operands feed the MXU at native rate; accumulate in f32.
            return jnp.dot(h_bf16, w_ref[...], preferred_element_type=jnp.float32)

        def accum_colsum(z):
            # Mask rows past the real batch (wrapper zero-pads the batch dim).
            rid = row0 + lax.broadcasted_iota(jnp.int32, (tile_b, 1), 0)
            zm = jnp.where(rid < batch, z, 0.0)

            @pl.when(t == 0)
            def _():
                sum_ref[...] = jnp.zeros_like(sum_ref)

            sum_ref[...] += jnp.sum(zm, axis=0, keepdims=True)

        def finalize_bn(g_ref, be_ref):
            # Centered two-pass variance: mean from the accumulated column
            # sums, then sum((z - mean)^2) over the whole-batch VMEM scratch
            # (already resident -> pure VPU work, no extra HBM traffic).
            mean = sum_ref[...] * inv_n                           # (1, H)
            rid = lax.broadcasted_iota(jnp.int32, (batch_pad, 1), 0)
            d = jnp.where(rid < batch, z_ref[...] - mean, 0.0)    # (B_pad, H)
            var = jnp.sum(d * d, axis=0, keepdims=True) * inv_n
            a = g_ref[...] * lax.rsqrt(var + BN_EPS)
            sc_ref[...] = a                                       # folded BN scale
            sh_ref[...] = be_ref[...] - mean * a                  # folded BN shift

        def bn_lrelu_tile():
            return _leaky_relu(z_ref[rows, :] * sc_ref[...] + sh_ref[...])

        # ---- phase 0: z1 = x @ W1 (bias dropped: BN mean-subtraction cancels it)
        @pl.when(p == 0)
        def _():
            z = matmul(x_ref[...], w1_ref)
            z_ref[rows, :] = z
            accum_colsum(z)

            @pl.when(t == nt - 1)
            def _():
                finalize_bn(g1_ref, be1_ref)

        # ---- phase 1: z2 = LReLU(bn(z1)) @ W2
        @pl.when(p == 1)
        def _():
            z = matmul(bn_lrelu_tile().astype(jnp.bfloat16), w2_ref)
            z_ref[rows, :] = z
            accum_colsum(z)

            @pl.when(t == nt - 1)
            def _():
                finalize_bn(g2_ref, be2_ref)

        # ---- phase 2: z3 = LReLU(bn(z2)) @ W3
        @pl.when(p == 2)
        def _():
            z = matmul(bn_lrelu_tile().astype(jnp.bfloat16), w3_ref)
            z_ref[rows, :] = z
            accum_colsum(z)

            @pl.when(t == nt - 1)
            def _():
                finalize_bn(g3_ref, be3_ref)

        # ---- phase 3: out = LReLU(LReLU(bn(z3)) @ W4 + b4) @ W5 + b5
        @pl.when(p == _NPH - 1)
        def _():
            h3 = bn_lrelu_tile().astype(jnp.bfloat16)
            z4 = _leaky_relu(matmul(h3, w4_ref) + b4_ref[...])
            o_ref[...] = matmul(z4.astype(jnp.bfloat16), w5_ref) + b5_ref[...]

    return kernel


# ----------------------------- wrapper -----------------------------

def backbone_forward(params, x, outp):
    """Whole backbone in one fused pallas_call. `outp` is the (static) true
    output width; the kernel computes a 128-lane padded output and we slice."""
    B, inp = x.shape
    H = params["l1_w"].shape[1]
    outp_pad = params["l5_w"].shape[1]

    # Batch tiling: one tile for small B, 512-row tiles otherwise.
    tile_b = _round_up(B, 8) if B <= 512 else 512
    b_pad = _round_up(B, tile_b)
    n_tiles = b_pad // tile_b

    # bf16 at the boundary halves the x HBM->VMEM DMA; zero-pad batch rows.
    x_p = x.astype(jnp.bfloat16)
    if b_pad != B:
        x_p = jnp.pad(x_p, ((0, b_pad - B), (0, 0)))

    args = (x_p,
            params["l1_w"], params["bn1_g"], params["bn1_b"],
            params["l2_w"], params["bn2_g"], params["bn2_b"],
            params["l3_w"], params["bn3_g"], params["bn3_b"],
            params["l4_w"], params["l4_b"],
            params["l5_w"], params["l5_b"])

    def resident(a):  # full-array block, constant index map -> DMA'd once, stays in VMEM
        return pl.BlockSpec(a.shape, lambda p, t: (0, 0))

    # x is only consumed in phase 0; output only written in the last phase.
    # Clamping the block index outside those phases avoids redundant DMAs.
    x_spec = pl.BlockSpec((tile_b, inp),
                          lambda p, t: (jnp.where(p == 0, t, 0), 0))
    o_spec = pl.BlockSpec((tile_b, outp_pad),
                          lambda p, t: (jnp.where(p == _NPH - 1, t, 0), 0))
    in_specs = [x_spec] + [resident(a) for a in args[1:]]

    # Per-shape VMEM budget (weights double-buffered, whole-batch activation
    # scratch, pipelined x/out tiles, working set for the 1024-wide layer).
    param_bytes = sum(int(a.size) * a.dtype.itemsize for a in args[1:])
    z_bytes = b_pad * max(H, 128) * 4
    io_bytes = 2 * tile_b * max(inp, 128) * 2 + 2 * tile_b * outp_pad * 4
    work_bytes = 4 * tile_b * L4_PAD * 4
    vmem_limit = int(min(max(2 * param_bytes + z_bytes + io_bytes + work_bytes
                             + (4 << 20), 32 << 20), 100 << 20))

    out = pl.pallas_call(
        _make_kernel(B, b_pad, tile_b),
        out_shape=jax.ShapeDtypeStruct((b_pad, outp_pad), jnp.float32),
        grid_spec=pltpu.PrefetchScalarGridSpec(
            num_scalar_prefetch=0,
            grid=(_NPH, n_tiles),
            in_specs=in_specs,
            out_specs=o_spec,
            scratch_shapes=[
                pltpu.VMEM((b_pad, H), jnp.float32),   # whole-batch pre-BN activation
                pltpu.VMEM((1, H), jnp.float32),       # column-sum accumulator
                pltpu.VMEM((1, H), jnp.float32),       # folded BN scale
                pltpu.VMEM((1, H), jnp.float32),       # folded BN shift
            ]),
        compiler_params=pltpu.CompilerParams(
            dimension_semantics=("arbitrary", "arbitrary"),
            vmem_limit_bytes=vmem_limit),
    )(*args)
    return out[:B, :outp]


# ----------------------------- parameters -----------------------------

def init_params(key, inp, hidden, outp):
    """Shapes mirror the PyTorch module. Weights stored (in, out) in bf16 for
    the MXU; biases / BN affine params are f32 rows (1, N). Pre-BN linear
    biases are omitted: BatchNorm's batch-mean subtraction cancels them
    exactly, so they never affect the forward output."""
    outp_pad = _round_up(outp, 128)

    def dense(k, fan_in, fan_out):
        kw, kb = jax.random.split(k)
        scale = 1.0 / jnp.sqrt(jnp.float32(fan_in))
        w = jax.random.uniform(kw, (fan_in, fan_out), jnp.float32, -scale, scale)
        b = jax.random.uniform(kb, (fan_out,), jnp.float32, -scale, scale)
        return w, b

    keys = jax.random.split(key, 5)
    p = {}

    # three Linear -> BN -> LeakyReLU blocks (bias cancelled by BN, not stored)
    for i, (fi, fo) in enumerate(((inp, hidden), (hidden, hidden), (hidden, hidden)),
                                 start=1):
        w, _b = dense(keys[i - 1], fi, fo)
        p[f"l{i}_w"] = w.astype(jnp.bfloat16)
        p[f"bn{i}_g"] = jnp.ones((1, fo), jnp.float32)
        p[f"bn{i}_b"] = jnp.zeros((1, fo), jnp.float32)

    # Linear(hidden, 1000): pad output columns 1000 -> 1024 with zeros.
    w4, b4 = dense(keys[3], hidden, L4_RAW)
    w4 = jnp.pad(w4, ((0, 0), (0, L4_PAD - L4_RAW)))
    b4 = jnp.pad(b4, (0, L4_PAD - L4_RAW))
    p["l4_w"] = w4.astype(jnp.bfloat16)
    p["l4_b"] = b4.reshape(1, -1)

    # Linear(1000, outp): pad input rows 1000 -> 1024 and output cols to 128n.
    w5, b5 = dense(keys[4], L4_RAW, outp)
    w5 = jnp.pad(w5, ((0, L4_PAD - L4_RAW), (0, outp_pad - outp)))
    b5 = jnp.pad(b5, (0, outp_pad - outp))
    p["l5_w"] = w5.astype(jnp.bfloat16)
    p["l5_b"] = b5.reshape(1, -1)
    return p


# ----------------------------- demo -----------------------------

if __name__ == "__main__":
    B, INP, HIDDEN, OUTP = 8, 16, 32, 64

    key = jax.random.PRNGKey(0)
    kp, kx = jax.random.split(key)
    params = init_params(kp, INP, HIDDEN, OUTP)
    x = jax.random.normal(kx, (B, INP), jnp.float32)

    fwd = jax.jit(backbone_forward, static_argnames=("outp",))
    out = fwd(params, x, outp=OUTP)
    jax.block_until_ready(out)

    assert out.shape == (B, OUTP)
    assert bool(jnp.all(jnp.isfinite(out)))
    print("KERNEL_OK")
</pallas_src>

<mosaic_0001>
module attributes {stable_mosaic.version = 11 : i64} {
  func.func @kernel(%arg0: i32, %arg1: i32, %arg2: memref<8x16xbf16, #tpu.memory_space<vmem>>, %arg3: memref<16x32xbf16, #tpu.memory_space<vmem>>, %arg4: memref<1x32xf32, #tpu.memory_space<vmem>>, %arg5: memref<1x32xf32, #tpu.memory_space<vmem>>, %arg6: memref<32x32xbf16, #tpu.memory_space<vmem>>, %arg7: memref<1x32xf32, #tpu.memory_space<vmem>>, %arg8: memref<1x32xf32, #tpu.memory_space<vmem>>, %arg9: memref<32x32xbf16, #tpu.memory_space<vmem>>, %arg10: memref<1x32xf32, #tpu.memory_space<vmem>>, %arg11: memref<1x32xf32, #tpu.memory_space<vmem>>, %arg12: memref<32x1024xbf16, #tpu.memory_space<vmem>>, %arg13: memref<1x1024xf32, #tpu.memory_space<vmem>>, %arg14: memref<1024x128xbf16, #tpu.memory_space<vmem>>, %arg15: memref<1x128xf32, #tpu.memory_space<vmem>>, %arg16: memref<8x128xf32, #tpu.memory_space<vmem>>, %arg17: memref<8x32xf32, #tpu.memory_space<vmem>>, %arg18: memref<1x32xf32, #tpu.memory_space<vmem>>, %arg19: memref<1x32xf32, #tpu.memory_space<vmem>>, %arg20: memref<1x32xf32, #tpu.memory_space<vmem>>) attributes {dimension_semantics = [#tpu.dimension_semantics<arbitrary>, #tpu.dimension_semantics<arbitrary>], iteration_bounds = array<i64: 4, 1>, scalar_prefetch = 0 : i64, scratch_operands = 4 : i64, tpu.core_type = #tpu.core_type<tc>, window_params = [{transform_indices = @transform_0, window_bounds = array<i64: 8, 16>}, {pipeline_mode = #tpu.pipeline_mode<synchronous>, transform_indices = @transform_1, window_bounds = array<i64: 16, 32>}, {pipeline_mode = #tpu.pipeline_mode<synchronous>, transform_indices = @transform_2, window_bounds = array<i64: 1, 32>}, {pipeline_mode = #tpu.pipeline_mode<synchronous>, transform_indices = @transform_3, window_bounds = array<i64: 1, 32>}, {pipeline_mode = #tpu.pipeline_mode<synchronous>, transform_indices = @transform_4, window_bounds = array<i64: 32, 32>}, {pipeline_mode = #tpu.pipeline_mode<synchronous>, transform_indices = @transform_5, window_bounds = array<i64: 1, 32>}, {pipeline_mode = #tpu.pipeline_mode<synchronous>, transform_indices = @transform_6, window_bounds = array<i64: 1, 32>}, {pipeline_mode = #tpu.pipeline_mode<synchronous>, transform_indices = @transform_7, window_bounds = array<i64: 32, 32>}, {pipeline_mode = #tpu.pipeline_mode<synchronous>, transform_indices = @transform_8, window_bounds = array<i64: 1, 32>}, {pipeline_mode = #tpu.pipeline_mode<synchronous>, transform_indices = @transform_9, window_bounds = array<i64: 1, 32>}, {pipeline_mode = #tpu.pipeline_mode<synchronous>, transform_indices = @transform_10, window_bounds = array<i64: 32, 1024>}, {pipeline_mode = #tpu.pipeline_mode<synchronous>, transform_indices = @transform_11, window_bounds = array<i64: 1, 1024>}, {pipeline_mode = #tpu.pipeline_mode<synchronous>, transform_indices = @transform_12, window_bounds = array<i64: 1024, 128>}, {pipeline_mode = #tpu.pipeline_mode<synchronous>, transform_indices = @transform_13, window_bounds = array<i64: 1, 128>}, {transform_indices = @transform_14, window_bounds = array<i64: 8, 128>}]} {
    %c8_i32 = arith.constant 8 : i32
    %0 = arith.muli %arg1, %c8_i32 : i32
    %1 = tpu.assume_multiple %0, 8 : i32
    %c0_i32 = arith.constant 0 : i32
    %2 = arith.cmpi eq, %arg0, %c0_i32 : i32
    %3 = arith.extui %2 : i1 to i32
    %c0_i32_0 = arith.constant 0 : i32
    %4 = arith.cmpi ne, %3, %c0_i32_0 : i32
    scf.if %4 {
      %c0 = arith.constant 0 : index
      %c0_4 = arith.constant 0 : index
      %14 = vector.load %arg2[%c0, %c0_4] : memref<8x16xbf16, #tpu.memory_space<vmem>>, vector<8x16xbf16>
      %c0_5 = arith.constant 0 : index
      %c0_6 = arith.constant 0 : index
      %15 = vector.load %arg3[%c0_5, %c0_6] : memref<16x32xbf16, #tpu.memory_space<vmem>>, vector<16x32xbf16>
      %cst = arith.constant dense<0.000000e+00> : vector<8x32xf32>
      %16 = tpu.matmul %14, %15, %cst {dimension_numbers = #tpu.dot_dimension_numbers<[1], [0], [0], [1], [0, 0, 1, 1], [], []>} : vector<8x16xbf16>, vector<16x32xbf16>, vector<8x32xf32> -> vector<8x32xf32>
      %17 = arith.index_cast %1 : i32 to index
      %c0_7 = arith.constant 0 : index
      %18 = vector.load %arg17[%17, %c0_7] : memref<8x32xf32, #tpu.memory_space<vmem>>, vector<8x32xf32>
      tpu.vector_store %arg17[%17, %c0_7], %16 {strides = array<i32>} : memref<8x32xf32, #tpu.memory_space<vmem>>, vector<8x32xf32>,
      %19 = tpu.iota {dimensions = array<i32: 0>} : vector<8x1xi32>
      %20 = vector.broadcast %1 : i32 to vector<8x1xi32>
      %21 = arith.addi %20, %19 : vector<8x1xi32>
      %c8_i32_8 = arith.constant 8 : i32
      %22 = vector.broadcast %c8_i32_8 : i32 to vector<8x1xi32>
      %23 = arith.cmpi slt, %21, %22 : vector<8x1xi32>
      %cst_9 = arith.constant 0.000000e+00 : f32
      %24 = vector.shape_cast %23 : vector<8x1xi1> to vector<8x1xi1>
      %25 = vector.broadcast %24 : vector<8x1xi1> to vector<8x32xi1>
      %26 = vector.broadcast %cst_9 : f32 to vector<8x32xf32>
      %27 = arith.select %25, %16, %26 : vector<8x32xi1>, vector<8x32xf32>
      %c0_i32_10 = arith.constant 0 : i32
      %28 = arith.cmpi eq, %arg1, %c0_i32_10 : i32
      %29 = arith.extui %28 : i1 to i32
      %c0_i32_11 = arith.constant 0 : i32
      %30 = arith.cmpi ne, %29, %c0_i32_11 : i32
      scf.if %30 {
        %cst_19 = arith.constant 0.000000e+00 : f32
        %39 = vector.broadcast %cst_19 : f32 to vector<1x32xf32>
        %c0_20 = arith.constant 0 : index
        %c0_21 = arith.constant 0 : index
        %40 = vector.load %arg18[%c0_20, %c0_21] : memref<1x32xf32, #tpu.memory_space<vmem>>, vector<1x32xf32>
        tpu.vector_store %arg18[%c0_20, %c0_21], %39 {strides = array<i32>} : memref<1x32xf32, #tpu.memory_space<vmem>>, vector<1x32xf32>,
      } else {
      }
      %c0_12 = arith.constant 0 : index
      %c0_13 = arith.constant 0 : index
      %31 = vector.load %arg18[%c0_12, %c0_13] : memref<1x32xf32, #tpu.memory_space<vmem>>, vector<1x32xf32>
      %cst_14 = arith.constant dense<0.000000e+00> : vector<32xf32>
      %32 = vector.multi_reduction <add>, %27, %cst_14 [0] : vector<8x32xf32> to vector<32xf32>
      %33 = vector.shape_cast %32 : vector<32xf32> to vector<1x32xf32>
      %34 = arith.addf %31, %33 : vector<1x32xf32>
      %c0_15 = arith.constant 0 : index
      %c0_16 = arith.constant 0 : index
      %35 = vector.load %arg18[%c0_15, %c0_16] : memref<1x32xf32, #tpu.memory_space<vmem>>, vector<1x32xf32>
      tpu.vector_store %arg18[%c0_15, %c0_16], %34 {strides = array<i32>} : memref<1x32xf32, #tpu.memory_space<vmem>>, vector<1x32xf32>,
      %c0_i32_17 = arith.constant 0 : i32
      %36 = arith.cmpi eq, %arg1, %c0_i32_17 : i32
      %37 = arith.extui %36 : i1 to i32
      %c0_i32_18 = arith.constant 0 : i32
      %38 = arith.cmpi ne, %37, %c0_i32_18 : i32
      scf.if %38 {
        %c0_19 = arith.constant 0 : index
        %c0_20 = arith.constant 0 : index
        %39 = vector.load %arg18[%c0_19, %c0_20] : memref<1x32xf32, #tpu.memory_space<vmem>>, vector<1x32xf32>
        %cst_21 = arith.constant 1.250000e-01 : f32
        %40 = vector.broadcast %cst_21 : f32 to vector<1x32xf32>
        %41 = arith.mulf %39, %40 : vector<1x32xf32>
        %42 = tpu.iota {dimensions = array<i32: 0>} : vector<8x1xi32>
        %c8_i32_22 = arith.constant 8 : i32
        %43 = vector.broadcast %c8_i32_22 : i32 to vector<8x1xi32>
        %44 = arith.cmpi slt, %42, %43 : vector<8x1xi32>
        %c0_23 = arith.constant 0 : index
        %c0_24 = arith.constant 0 : index
        %45 = vector.load %arg17[%c0_23, %c0_24] : memref<8x32xf32, #tpu.memory_space<vmem>>, vector<8x32xf32>
        %46 = vector.broadcast %41 : vector<1x32xf32> to vector<8x32xf32>
        %47 = arith.subf %45, %46 : vector<8x32xf32>
        %cst_25 = arith.constant 0.000000e+00 : f32
        %48 = vector.shape_cast %44 : vector<8x1xi1> to vector<8x1xi1>
        %49 = vector.broadcast %48 : vector<8x1xi1> to vector<8x32xi1>
        %50 = vector.broadcast %cst_25 : f32 to vector<8x32xf32>
        %51 = arith.select %49, %47, %50 : vector<8x32xi1>, vector<8x32xf32>
        %52 = arith.mulf %51, %51 : vector<8x32xf32>
        %cst_26 = arith.constant dense<0.000000e+00> : vector<32xf32>
        %53 = vector.multi_reduction <add>, %52, %cst_26 [0] : vector<8x32xf32> to vector<32xf32>
        %54 = vector.shape_cast %53 : vector<32xf32> to vector<1x32xf32>
        %cst_27 = arith.constant 1.250000e-01 : f32
        %55 = vector.broadcast %cst_27 : f32 to vector<1x32xf32>
        %56 = arith.mulf %54, %55 : vector<1x32xf32>
        %c0_28 = arith.constant 0 : index
        %c0_29 = arith.constant 0 : index
        %57 = vector.load %arg4[%c0_28, %c0_29] : memref<1x32xf32, #tpu.memory_space<vmem>>, vector<1x32xf32>
        %cst_30 = arith.constant 9.99999974E-6 : f32
        %58 = vector.broadcast %cst_30 : f32 to vector<1x32xf32>
        %59 = arith.addf %56, %58 : vector<1x32xf32>
        %60 = math.rsqrt %59 : vector<1x32xf32>
        %61 = arith.mulf %57, %60 : vector<1x32xf32>
        %c0_31 = arith.constant 0 : index
        %c0_32 = arith.constant 0 : index
        %62 = vector.load %arg19[%c0_31, %c0_32] : memref<1x32xf32, #tpu.memory_space<vmem>>, vector<1x32xf32>
        tpu.vector_store %arg19[%c0_31, %c0_32], %61 {strides = array<i32>} : memref<1x32xf32, #tpu.memory_space<vmem>>, vector<1x32xf32>,
        %c0_33 = arith.constant 0 : index
        %c0_34 = arith.constant 0 : index
        %63 = vector.load %arg5[%c0_33, %c0_34] : memref<1x32xf32, #tpu.memory_space<vmem>>, vector<1x32xf32>
        %64 = arith.mulf %41, %61 : vector<1x32xf32>
        %65 = arith.subf %63, %64 : vector<1x32xf32>
        %c0_35 = arith.constant 0 : index
        %c0_36 = arith.constant 0 : index
        %66 = vector.load %arg20[%c0_35, %c0_36] : memref<1x32xf32, #tpu.memory_space<vmem>>, vector<1x32xf32>
        tpu.vector_store %arg20[%c0_35, %c0_36], %65 {strides = array<i32>} : memref<1x32xf32, #tpu.memory_space<vmem>>, vector<1x32xf32>,
      } else {
      }
    } else {
    }
    %c1_i32 = arith.constant 1 : i32
    %5 = arith.cmpi eq, %arg0, %c1_i32 : i32
    %6 = arith.extui %5 : i1 to i32
    %c0_i32_1 = arith.constant 0 : i32
    %7 = arith.cmpi ne, %6, %c0_i32_1 : i32
    scf.if %7 {
      %14 = arith.index_cast %1 : i32 to index
      %c0 = arith.constant 0 : index
      %15 = vector.load %arg17[%14, %c0] : memref<8x32xf32, #tpu.memory_space<vmem>>, vector<8x32xf32>
      %c0_4 = arith.constant 0 : index
      %c0_5 = arith.constant 0 : index
      %16 = vector.load %arg19[%c0_4, %c0_5] : memref<1x32xf32, #tpu.memory_space<vmem>>, vector<1x32xf32>
      %17 = vector.broadcast %16 : vector<1x32xf32> to vector<8x32xf32>
      %18 = arith.mulf %15, %17 : vector<8x32xf32>
      %c0_6 = arith.constant 0 : index
      %c0_7 = arith.constant 0 : index
      %19 = vector.load %arg20[%c0_6, %c0_7] : memref<1x32xf32, #tpu.memory_space<vmem>>, vector<1x32xf32>
      %20 = vector.broadcast %19 : vector<1x32xf32> to vector<8x32xf32>
      %21 = arith.addf %18, %20 : vector<8x32xf32>
      %cst = arith.constant 0.000000e+00 : f32
      %22 = vector.broadcast %cst : f32 to vector<8x32xf32>
      %23 = arith.cmpf oge, %21, %22 : vector<8x32xf32>
      %cst_8 = arith.constant 0.00999999977 : f32
      %24 = vector.broadcast %cst_8 : f32 to vector<8x32xf32>
      %25 = arith.mulf %24, %21 : vector<8x32xf32>
      %26 = arith.select %23, %21, %25 : vector<8x32xi1>, vector<8x32xf32>
      %27 = arith.truncf %26 : vector<8x32xf32> to vector<8x32xbf16>
      %c0_9 = arith.constant 0 : index
      %c0_10 = arith.constant 0 : index
      %28 = vector.load %arg6[%c0_9, %c0_10] : memref<32x32xbf16, #tpu.memory_space<vmem>>, vector<32x32xbf16>
      %cst_11 = arith.constant dense<0.000000e+00> : vector<8x32xf32>
      %29 = tpu.matmul %27, %28, %cst_11 {dimension_numbers = #tpu.dot_dimension_numbers<[1], [0], [0], [1], [0, 0, 1, 1], [], []>} : vector<8x32xbf16>, vector<32x32xbf16>, vector<8x32xf32> -> vector<8x32xf32>
      %30 = arith.index_cast %1 : i32 to index
      %c0_12 = arith.constant 0 : index
      %31 = vector.load %arg17[%30, %c0_12] : memref<8x32xf32, #tpu.memory_space<vmem>>, vector<8x32xf32>
      tpu.vector_store %arg17[%30, %c0_12], %29 {strides = array<i32>} : memref<8x32xf32, #tpu.memory_space<vmem>>, vector<8x32xf32>,
      %32 = tpu.iota {dimensions = array<i32: 0>} : vector<8x1xi32>
      %33 = vector.broadcast %1 : i32 to vector<8x1xi32>
      %34 = arith.addi %33, %32 : vector<8x1xi32>
      %c8_i32_13 = arith.constant 8 : i32
      %35 = vector.broadcast %c8_i32_13 : i32 to vector<8x1xi32>
      %36 = arith.cmpi slt, %34, %35 : vector<8x1xi32>
      %cst_14 = arith.constant 0.000000e+00 : f32
      %37 = vector.shape_cast %36 : vector<8x1xi1> to vector<8x1xi1>
      %38 = vector.broadcast %37 : vector<8x1xi1> to vector<8x32xi1>
      %39 = vector.broadcast %cst_14 : f32 to vector<8x32xf32>
      %40 = arith.select %38, %29, %39 : vector<8x32xi1>, vector<8x32xf32>
      %c0_i32_15 = arith.constant 0 : i32
      %41 = arith.cmpi eq, %arg1, %c0_i32_15 : i32
      %42 = arith.extui %41 : i1 to i32
      %c0_i32_16 = arith.constant 0 : i32
      %43 = arith.cmpi ne, %42, %c0_i32_16 : i32
      scf.if %43 {
        %cst_24 = arith.constant 0.000000e+00 : f32
        %52 = vector.broadcast %cst_24 : f32 to vector<1x32xf32>
        %c0_25 = arith.constant 0 : index
        %c0_26 = arith.constant 0 : index
        %53 = vector.load %arg18[%c0_25, %c0_26] : memref<1x32xf32, #tpu.memory_space<vmem>>, vector<1x32xf32>
        tpu.vector_store %arg18[%c0_25, %c0_26], %52 {strides = array<i32>} : memref<1x32xf32, #tpu.memory_space<vmem>>, vector<1x32xf32>,
      } else {
      }
      %c0_17 = arith.constant 0 : index
      %c0_18 = arith.constant 0 : index
      %44 = vector.load %arg18[%c0_17, %c0_18] : memref<1x32xf32, #tpu.memory_space<vmem>>, vector<1x32xf32>
      %cst_19 = arith.constant dense<0.000000e+00> : vector<32xf32>
      %45 = vector.multi_reduction <add>, %40, %cst_19 [0] : vector<8x32xf32> to vector<32xf32>
      %46 = vector.shape_cast %45 : vector<32xf32> to vector<1x32xf32>
      %47 = arith.addf %44, %46 : vector<1x32xf32>
      %c0_20 = arith.constant 0 : index
      %c0_21 = arith.constant 0 : index
      %48 = vector.load %arg18[%c0_20, %c0_21] : memref<1x32xf32, #tpu.memory_space<vmem>>, vector<1x32xf32>
      tpu.vector_store %arg18[%c0_20, %c0_21], %47 {strides = array<i32>} : memref<1x32xf32, #tpu.memory_space<vmem>>, vector<1x32xf32>,
      %c0_i32_22 = arith.constant 0 : i32
      %49 = arith.cmpi eq, %arg1, %c0_i32_22 : i32
      %50 = arith.extui %49 : i1 to i32
      %c0_i32_23 = arith.constant 0 : i32
      %51 = arith.cmpi ne, %50, %c0_i32_23 : i32
      scf.if %51 {
        %c0_24 = arith.constant 0 : index
        %c0_25 = arith.constant 0 : index
        %52 = vector.load %arg18[%c0_24, %c0_25] : memref<1x32xf32, #tpu.memory_space<vmem>>, vector<1x32xf32>
        %cst_26 = arith.constant 1.250000e-01 : f32
        %53 = vector.broadcast %cst_26 : f32 to vector<1x32xf32>
        %54 = arith.mulf %52, %53 : vector<1x32xf32>
        %55 = tpu.iota {dimensions = array<i32: 0>} : vector<8x1xi32>
        %c8_i32_27 = arith.constant 8 : i32
        %56 = vector.broadcast %c8_i32_27 : i32 to vector<8x1xi32>
        %57 = arith.cmpi slt, %55, %56 : vector<8x1xi32>
        %c0_28 = arith.constant 0 : index
        %c0_29 = arith.constant 0 : index
        %58 = vector.load %arg17[%c0_28, %c0_29] : memref<8x32xf32, #tpu.memory_space<vmem>>, vector<8x32xf32>
        %59 = vector.broadcast %54 : vector<1x32xf32> to vector<8x32xf32>
        %60 = arith.subf %58, %59 : vector<8x32xf32>
        %cst_30 = arith.constant 0.000000e+00 : f32
        %61 = vector.shape_cast %57 : vector<8x1xi1> to vector<8x1xi1>
        %62 = vector.broadcast %61 : vector<8x1xi1> to vector<8x32xi1>
        %63 = vector.broadcast %cst_30 : f32 to vector<8x32xf32>
        %64 = arith.select %62, %60, %63 : vector<8x32xi1>, vector<8x32xf32>
        %65 = arith.mulf %64, %64 : vector<8x32xf32>
        %cst_31 = arith.constant dense<0.000000e+00> : vector<32xf32>
        %66 = vector.multi_reduction <add>, %65, %cst_31 [0] : vector<8x32xf32> to vector<32xf32>
        %67 = vector.shape_cast %66 : vector<32xf32> to vector<1x32xf32>
        %cst_32 = arith.constant 1.250000e-01 : f32
        %68 = vector.broadcast %cst_32 : f32 to vector<1x32xf32>
        %69 = arith.mulf %67, %68 : vector<1x32xf32>
        %c0_33 = arith.constant 0 : index
        %c0_34 = arith.constant 0 : index
        %70 = vector.load %arg7[%c0_33, %c0_34] : memref<1x32xf32, #tpu.memory_space<vmem>>, vector<1x32xf32>
        %cst_35 = arith.constant 9.99999974E-6 : f32
        %71 = vector.broadcast %cst_35 : f32 to vector<1x32xf32>
        %72 = arith.addf %69, %71 : vector<1x32xf32>
        %73 = math.rsqrt %72 : vector<1x32xf32>
        %74 = arith.mulf %70, %73 : vector<1x32xf32>
        %c0_36 = arith.constant 0 : index
        %c0_37 = arith.constant 0 : index
        %75 = vector.load %arg19[%c0_36, %c0_37] : memref<1x32xf32, #tpu.memory_space<vmem>>, vector<1x32xf32>
        tpu.vector_store %arg19[%c0_36, %c0_37], %74 {strides = array<i32>} : memref<1x32xf32, #tpu.memory_space<vmem>>, vector<1x32xf32>,
        %c0_38 = arith.constant 0 : index
        %c0_39 = arith.constant 0 : index
        %76 = vector.load %arg8[%c0_38, %c0_39] : memref<1x32xf32, #tpu.memory_space<vmem>>, vector<1x32xf32>
        %77 = arith.mulf %54, %74 : vector<1x32xf32>
        %78 = arith.subf %76, %77 : vector<1x32xf32>
        %c0_40 = arith.constant 0 : index
        %c0_41 = arith.constant 0 : index
        %79 = vector.load %arg20[%c0_40, %c0_41] : memref<1x32xf32, #tpu.memory_space<vmem>>, vector<1x32xf32>
        tpu.vector_store %arg20[%c0_40, %c0_41], %78 {strides = array<i32>} : memref<1x32xf32, #tpu.memory_space<vmem>>, vector<1x32xf32>,
      } else {
      }
    } else {
    }
    %c2_i32 = arith.constant 2 : i32
    %8 = arith.cmpi eq, %arg0, %c2_i32 : i32
    %9 = arith.extui %8 : i1 to i32
    %c0_i32_2 = arith.constant 0 : i32
    %10 = arith.cmpi ne, %9, %c0_i32_2 : i32
    scf.if %10 {
      %14 = arith.index_cast %1 : i32 to index
      %c0 = arith.constant 0 : index
      %15 = vector.load %arg17[%14, %c0] : memref<8x32xf32, #tpu.memory_space<vmem>>, vector<8x32xf32>
      %c0_4 = arith.constant 0 : index
      %c0_5 = arith.constant 0 : index
      %16 = vector.load %arg19[%c0_4, %c0_5] : memref<1x32xf32, #tpu.memory_space<vmem>>, vector<1x32xf32>
      %17 = vector.broadcast %16 : vector<1x32xf32> to vector<8x32xf32>
      %18 = arith.mulf %15, %17 : vector<8x32xf32>
      %c0_6 = arith.constant 0 : index
      %c0_7 = arith.constant 0 : index
      %19 = vector.load %arg20[%c0_6, %c0_7] : memref<1x32xf32, #tpu.memory_space<vmem>>, vector<1x32xf32>
      %20 = vector.broadcast %19 : vector<1x32xf32> to vector<8x32xf32>
      %21 = arith.addf %18, %20 : vector<8x32xf32>
      %cst = arith.constant 0.000000e+00 : f32
      %22 = vector.broadcast %cst : f32 to vector<8x32xf32>
      %23 = arith.cmpf oge, %21, %22 : vector<8x32xf32>
      %cst_8 = arith.constant 0.00999999977 : f32
      %24 = vector.broadcast %cst_8 : f32 to vector<8x32xf32>
      %25 = arith.mulf %24, %21 : vector<8x32xf32>
      %26 = arith.select %23, %21, %25 : vector<8x32xi1>, vector<8x32xf32>
      %27 = arith.truncf %26 : vector<8x32xf32> to vector<8x32xbf16>
      %c0_9 = arith.constant 0 : index
      %c0_10 = arith.constant 0 : index
      %28 = vector.load %arg9[%c0_9, %c0_10] : memref<32x32xbf16, #tpu.memory_space<vmem>>, vector<32x32xbf16>
      %cst_11 = arith.constant dense<0.000000e+00> : vector<8x32xf32>
      %29 = tpu.matmul %27, %28, %cst_11 {dimension_numbers = #tpu.dot_dimension_numbers<[1], [0], [0], [1], [0, 0, 1, 1], [], []>} : vector<8x32xbf16>, vector<32x32xbf16>, vector<8x32xf32> -> vector<8x32xf32>
      %30 = arith.index_cast %1 : i32 to index
      %c0_12 = arith.constant 0 : index
      %31 = vector.load %arg17[%30, %c0_12] : memref<8x32xf32, #tpu.memory_space<vmem>>, vector<8x32xf32>
      tpu.vector_store %arg17[%30, %c0_12], %29 {strides = array<i32>} : memref<8x32xf32, #tpu.memory_space<vmem>>, vector<8x32xf32>,
      %32 = tpu.iota {dimensions = array<i32: 0>} : vector<8x1xi32>
      %33 = vector.broadcast %1 : i32 to vector<8x1xi32>
      %34 = arith.addi %33, %32 : vector<8x1xi32>
      %c8_i32_13 = arith.constant 8 : i32
      %35 = vector.broadcast %c8_i32_13 : i32 to vector<8x1xi32>
      %36 = arith.cmpi slt, %34, %35 : vector<8x1xi32>
      %cst_14 = arith.constant 0.000000e+00 : f32
      %37 = vector.shape_cast %36 : vector<8x1xi1> to vector<8x1xi1>
      %38 = vector.broadcast %37 : vector<8x1xi1> to vector<8x32xi1>
      %39 = vector.broadcast %cst_14 : f32 to vector<8x32xf32>
      %40 = arith.select %38, %29, %39 : vector<8x32xi1>, vector<8x32xf32>
      %c0_i32_15 = arith.constant 0 : i32
      %41 = arith.cmpi eq, %arg1, %c0_i32_15 : i32
      %42 = arith.extui %41 : i1 to i32
      %c0_i32_16 = arith.constant 0 : i32
      %43 = arith.cmpi ne, %42, %c0_i32_16 : i32
      scf.if %43 {
        %cst_24 = arith.constant 0.000000e+00 : f32
        %52 = vector.broadcast %cst_24 : f32 to vector<1x32xf32>
        %c0_25 = arith.constant 0 : index
        %c0_26 = arith.constant 0 : index
        %53 = vector.load %arg18[%c0_25, %c0_26] : memref<1x32xf32, #tpu.memory_space<vmem>>, vector<1x32xf32>
        tpu.vector_store %arg18[%c0_25, %c0_26], %52 {strides = array<i32>} : memref<1x32xf32, #tpu.memory_space<vmem>>, vector<1x32xf32>,
      } else {
      }
      %c0_17 = arith.constant 0 : index
      %c0_18 = arith.constant 0 : index
      %44 = vector.load %arg18[%c0_17, %c0_18] : memref<1x32xf32, #tpu.memory_space<vmem>>, vector<1x32xf32>
      %cst_19 = arith.constant dense<0.000000e+00> : vector<32xf32>
      %45 = vector.multi_reduction <add>, %40, %cst_19 [0] : vector<8x32xf32> to vector<32xf32>
      %46 = vector.shape_cast %45 : vector<32xf32> to vector<1x32xf32>
      %47 = arith.addf %44, %46 : vector<1x32xf32>
      %c0_20 = arith.constant 0 : index
      %c0_21 = arith.constant 0 : index
      %48 = vector.load %arg18[%c0_20, %c0_21] : memref<1x32xf32, #tpu.memory_space<vmem>>, vector<1x32xf32>
      tpu.vector_store %arg18[%c0_20, %c0_21], %47 {strides = array<i32>} : memref<1x32xf32, #tpu.memory_space<vmem>>, vector<1x32xf32>,
      %c0_i32_22 = arith.constant 0 : i32
      %49 = arith.cmpi eq, %arg1, %c0_i32_22 : i32
      %50 = arith.extui %49 : i1 to i32
      %c0_i32_23 = arith.constant 0 : i32
      %51 = arith.cmpi ne, %50, %c0_i32_23 : i32
      scf.if %51 {
        %c0_24 = arith.constant 0 : index
        %c0_25 = arith.constant 0 : index
        %52 = vector.load %arg18[%c0_24, %c0_25] : memref<1x32xf32, #tpu.memory_space<vmem>>, vector<1x32xf32>
        %cst_26 = arith.constant 1.250000e-01 : f32
        %53 = vector.broadcast %cst_26 : f32 to vector<1x32xf32>
        %54 = arith.mulf %52, %53 : vector<1x32xf32>
        %55 = tpu.iota {dimensions = array<i32: 0>} : vector<8x1xi32>
        %c8_i32_27 = arith.constant 8 : i32
        %56 = vector.broadcast %c8_i32_27 : i32 to vector<8x1xi32>
        %57 = arith.cmpi slt, %55, %56 : vector<8x1xi32>
        %c0_28 = arith.constant 0 : index
        %c0_29 = arith.constant 0 : index
        %58 = vector.load %arg17[%c0_28, %c0_29] : memref<8x32xf32, #tpu.memory_space<vmem>>, vector<8x32xf32>
        %59 = vector.broadcast %54 : vector<1x32xf32> to vector<8x32xf32>
        %60 = arith.subf %58, %59 : vector<8x32xf32>
        %cst_30 = arith.constant 0.000000e+00 : f32
        %61 = vector.shape_cast %57 : vector<8x1xi1> to vector<8x1xi1>
        %62 = vector.broadcast %61 : vector<8x1xi1> to vector<8x32xi1>
        %63 = vector.broadcast %cst_30 : f32 to vector<8x32xf32>
        %64 = arith.select %62, %60, %63 : vector<8x32xi1>, vector<8x32xf32>
        %65 = arith.mulf %64, %64 : vector<8x32xf32>
        %cst_31 = arith.constant dense<0.000000e+00> : vector<32xf32>
        %66 = vector.multi_reduction <add>, %65, %cst_31 [0] : vector<8x32xf32> to vector<32xf32>
        %67 = vector.shape_cast %66 : vector<32xf32> to vector<1x32xf32>
        %cst_32 = arith.constant 1.250000e-01 : f32
        %68 = vector.broadcast %cst_32 : f32 to vector<1x32xf32>
        %69 = arith.mulf %67, %68 : vector<1x32xf32>
        %c0_33 = arith.constant 0 : index
        %c0_34 = arith.constant 0 : index
        %70 = vector.load %arg10[%c0_33, %c0_34] : memref<1x32xf32, #tpu.memory_space<vmem>>, vector<1x32xf32>
        %cst_35 = arith.constant 9.99999974E-6 : f32
        %71 = vector.broadcast %cst_35 : f32 to vector<1x32xf32>
        %72 = arith.addf %69, %71 : vector<1x32xf32>
        %73 = math.rsqrt %72 : vector<1x32xf32>
        %74 = arith.mulf %70, %73 : vector<1x32xf32>
        %c0_36 = arith.constant 0 : index
        %c0_37 = arith.constant 0 : index
        %75 = vector.load %arg19[%c0_36, %c0_37] : memref<1x32xf32, #tpu.memory_space<vmem>>, vector<1x32xf32>
        tpu.vector_store %arg19[%c0_36, %c0_37], %74 {strides = array<i32>} : memref<1x32xf32, #tpu.memory_space<vmem>>, vector<1x32xf32>,
        %c0_38 = arith.constant 0 : index
        %c0_39 = arith.constant 0 : index
        %76 = vector.load %arg11[%c0_38, %c0_39] : memref<1x32xf32, #tpu.memory_space<vmem>>, vector<1x32xf32>
        %77 = arith.mulf %54, %74 : vector<1x32xf32>
        %78 = arith.subf %76, %77 : vector<1x32xf32>
        %c0_40 = arith.constant 0 : index
        %c0_41 = arith.constant 0 : index
        %79 = vector.load %arg20[%c0_40, %c0_41] : memref<1x32xf32, #tpu.memory_space<vmem>>, vector<1x32xf32>
        tpu.vector_store %arg20[%c0_40, %c0_41], %78 {strides = array<i32>} : memref<1x32xf32, #tpu.memory_space<vmem>>, vector<1x32xf32>,
      } else {
      }
    } else {
    }
    %c3_i32 = arith.constant 3 : i32
    %11 = arith.cmpi eq, %arg0, %c3_i32 : i32
    %12 = arith.extui %11 : i1 to i32
    %c0_i32_3 = arith.constant 0 : i32
    %13 = arith.cmpi ne, %12, %c0_i32_3 : i32
    scf.if %13 {
      %14 = arith.index_cast %1 : i32 to index
      %c0 = arith.constant 0 : index
      %15 = vector.load %arg17[%14, %c0] : memref<8x32xf32, #tpu.memory_space<vmem>>, vector<8x32xf32>
      %c0_4 = arith.constant 0 : index
      %c0_5 = arith.constant 0 : index
      %16 = vector.load %arg19[%c0_4, %c0_5] : memref<1x32xf32, #tpu.memory_space<vmem>>, vector<1x32xf32>
      %17 = vector.broadcast %16 : vector<1x32xf32> to vector<8x32xf32>
      %18 = arith.mulf %15, %17 : vector<8x32xf32>
      %c0_6 = arith.constant 0 : index
      %c0_7 = arith.constant 0 : index
      %19 = vector.load %arg20[%c0_6, %c0_7] : memref<1x32xf32, #tpu.memory_space<vmem>>, vector<1x32xf32>
      %20 = vector.broadcast %19 : vector<1x32xf32> to vector<8x32xf32>
      %21 = arith.addf %18, %20 : vector<8x32xf32>
      %cst = arith.constant 0.000000e+00 : f32
      %22 = vector.broadcast %cst : f32 to vector<8x32xf32>
      %23 = arith.cmpf oge, %21, %22 : vector<8x32xf32>
      %cst_8 = arith.constant 0.00999999977 : f32
      %24 = vector.broadcast %cst_8 : f32 to vector<8x32xf32>
      %25 = arith.mulf %24, %21 : vector<8x32xf32>
      %26 = arith.select %23, %21, %25 : vector<8x32xi1>, vector<8x32xf32>
      %27 = arith.truncf %26 : vector<8x32xf32> to vector<8x32xbf16>
      %c0_9 = arith.constant 0 : index
      %c0_10 = arith.constant 0 : index
      %28 = vector.load %arg12[%c0_9, %c0_10] : memref<32x1024xbf16, #tpu.memory_space<vmem>>, vector<32x1024xbf16>
      %cst_11 = arith.constant dense<0.000000e+00> : vector<8x1024xf32>
      %29 = tpu.matmul %27, %28, %cst_11 {dimension_numbers = #tpu.dot_dimension_numbers<[1], [0], [0], [1], [0, 0, 1, 1], [], []>} : vector<8x32xbf16>, vector<32x1024xbf16>, vector<8x1024xf32> -> vector<8x1024xf32>
      %c0_12 = arith.constant 0 : index
      %c0_13 = arith.constant 0 : index
      %30 = vector.load %arg13[%c0_12, %c0_13] : memref<1x1024xf32, #tpu.memory_space<vmem>>, vector<1x1024xf32>
      %31 = vector.broadcast %30 : vector<1x1024xf32> to vector<8x1024xf32>
      %32 = arith.addf %29, %31 : vector<8x1024xf32>
      %cst_14 = arith.constant 0.000000e+00 : f32
      %33 = vector.broadcast %cst_14 : f32 to vector<8x1024xf32>
      %34 = arith.cmpf oge, %32, %33 : vector<8x1024xf32>
      %cst_15 = arith.constant 0.00999999977 : f32
      %35 = vector.broadcast %cst_15 : f32 to vector<8x1024xf32>
      %36 = arith.mulf %35, %32 : vector<8x1024xf32>
      %37 = arith.select %34, %32, %36 : vector<8x1024xi1>, vector<8x1024xf32>
      %38 = arith.truncf %37 : vector<8x1024xf32> to vector<8x1024xbf16>
      %c0_16 = arith.constant 0 : index
      %c0_17 = arith.constant 0 : index
      %39 = vector.load %arg14[%c0_16, %c0_17] : memref<1024x128xbf16, #tpu.memory_space<vmem>>, vector<1024x128xbf16>
      %cst_18 = arith.constant dense<0.000000e+00> : vector<8x128xf32>
      %40 = tpu.matmul %38, %39, %cst_18 {dimension_numbers = #tpu.dot_dimension_numbers<[1], [0], [0], [1], [0, 0, 1, 1], [], []>} : vector<8x1024xbf16>, vector<1024x128xbf16>, vector<8x128xf32> -> vector<8x128xf32>
      %c0_19 = arith.constant 0 : index
      %c0_20 = arith.constant 0 : index
      %41 = vector.load %arg15[%c0_19, %c0_20] : memref<1x128xf32, #tpu.memory_space<vmem>>, vector<1x128xf32>
      %42 = vector.broadcast %41 : vector<1x128xf32> to vector<8x128xf32>
      %43 = arith.addf %40, %42 : vector<8x128xf32>
      %c0_21 = arith.constant 0 : index
      %c0_22 = arith.constant 0 : index
      %44 = vector.load %arg16[%c0_21, %c0_22] : memref<8x128xf32, #tpu.memory_space<vmem>>, vector<8x128xf32>
      tpu.vector_store %arg16[%c0_21, %c0_22], %43 {strides = array<i32>} : memref<8x128xf32, #tpu.memory_space<vmem>>, vector<8x128xf32>,
    } else {
    }
    return
  }
  func.func @transform_0(%arg0: i32, %arg1: i32) -> (i32, i32) {
    %c0_i32 = arith.constant 0 : i32
    %0 = arith.cmpi eq, %arg0, %c0_i32 : i32
    %c0_i32_0 = arith.constant 0 : i32
    %1 = arith.select %0, %arg1, %c0_i32_0 : i32
    %c0_i32_1 = arith.constant 0 : i32
    %c0_i32_2 = arith.constant 0 : i32
    return %1, %c0_i32_1 : i32, i32
  }
  func.func @transform_1(%arg0: i32, %arg1: i32) -> (i32, i32) {
    %c0_i32 = arith.constant 0 : i32
    %c0_i32_0 = arith.constant 0 : i32
    %c0_i32_1 = arith.constant 0 : i32
    return %c0_i32, %c0_i32_0 : i32, i32
  }
  func.func @transform_2(%arg0: i32, %arg1: i32) -> (i32, i32) {
    %c0_i32 = arith.constant 0 : i32
    %c0_i32_0 = arith.constant 0 : i32
    %c0_i32_1 = arith.constant 0 : i32
    return %c0_i32, %c0_i32_0 : i32, i32
  }
  func.func @transform_3(%arg0: i32, %arg1: i32) -> (i32, i32) {
    %c0_i32 = arith.constant 0 : i32
    %c0_i32_0 = arith.constant 0 : i32
    %c0_i32_1 = arith.constant 0 : i32
    return %c0_i32, %c0_i32_0 : i32, i32
  }
  func.func @transform_4(%arg0: i32, %arg1: i32) -> (i32, i32) {
    %c0_i32 = arith.constant 0 : i32
    %c0_i32_0 = arith.constant 0 : i32
    %c0_i32_1 = arith.constant 0 : i32
    return %c0_i32, %c0_i32_0 : i32, i32
  }
  func.func @transform_5(%arg0: i32, %arg1: i32) -> (i32, i32) {
    %c0_i32 = arith.constant 0 : i32
    %c0_i32_0 = arith.constant 0 : i32
    %c0_i32_1 = arith.constant 0 : i32
    return %c0_i32, %c0_i32_0 : i32, i32
  }
  func.func @transform_6(%arg0: i32, %arg1: i32) -> (i32, i32) {
    %c0_i32 = arith.constant 0 : i32
    %c0_i32_0 = arith.constant 0 : i32
    %c0_i32_1 = arith.constant 0 : i32
    return %c0_i32, %c0_i32_0 : i32, i32
  }
  func.func @transform_7(%arg0: i32, %arg1: i32) -> (i32, i32) {
    %c0_i32 = arith.constant 0 : i32
    %c0_i32_0 = arith.constant 0 : i32
    %c0_i32_1 = arith.constant 0 : i32
    return %c0_i32, %c0_i32_0 : i32, i32
  }
  func.func @transform_8(%arg0: i32, %arg1: i32) -> (i32, i32) {
    %c0_i32 = arith.constant 0 : i32
    %c0_i32_0 = arith.constant 0 : i32
    %c0_i32_1 = arith.constant 0 : i32
    return %c0_i32, %c0_i32_0 : i32, i32
  }
  func.func @transform_9(%arg0: i32, %arg1: i32) -> (i32, i32) {
    %c0_i32 = arith.constant 0 : i32
    %c0_i32_0 = arith.constant 0 : i32
    %c0_i32_1 = arith.constant 0 : i32
    return %c0_i32, %c0_i32_0 : i32, i32
  }
  func.func @transform_10(%arg0: i32, %arg1: i32) -> (i32, i32) {
    %c0_i32 = arith.constant 0 : i32
    %c0_i32_0 = arith.constant 0 : i32
    %c0_i32_1 = arith.constant 0 : i32
    return %c0_i32, %c0_i32_0 : i32, i32
  }
  func.func @transform_11(%arg0: i32, %arg1: i32) -> (i32, i32) {
    %c0_i32 = arith.constant 0 : i32
    %c0_i32_0 = arith.constant 0 : i32
    %c0_i32_1 = arith.constant 0 : i32
    return %c0_i32, %c0_i32_0 : i32, i32
  }
  func.func @transform_12(%arg0: i32, %arg1: i32) -> (i32, i32) {
    %c0_i32 = arith.constant 0 : i32
    %c0_i32_0 = arith.constant 0 : i32
    %c0_i32_1 = arith.constant 0 : i32
    return %c0_i32, %c0_i32_0 : i32, i32
  }
  func.func @transform_13(%arg0: i32, %arg1: i32) -> (i32, i32) {
    %c0_i32 = arith.constant 0 : i32
    %c0_i32_0 = arith.constant 0 : i32
    %c0_i32_1 = arith.constant 0 : i32
    return %c0_i32, %c0_i32_0 : i32, i32
  }
  func.func @transform_14(%arg0: i32, %arg1: i32) -> (i32, i32) {
    %c3_i32 = arith.constant 3 : i32
    %0 = arith.cmpi eq, %arg0, %c3_i32 : i32
    %c0_i32 = arith.constant 0 : i32
    %1 = arith.select %0, %arg1, %c0_i32 : i32
    %c0_i32_0 = arith.constant 0 : i32
    %c0_i32_1 = arith.constant 0 : i32
    return %1, %c0_i32_0 : i32, i32
  }
}

</mosaic_0001>

<llo_original>
// kernel: backbone_forward.1
$region0: #{backbone_forward.1}
  #allocation0 [shape = 'u32[]', space=smem, size = 0x4, offset = 0x4, fixed_abs, tag = 'smem constant byte address 0x4 - core index']
  #allocation1 [shape = 'u32[144,128]{1,0:T(1,128)}', space=vmem, size = 0x12000, scoped, tag = 'internal scratch']
  #allocation2 [shape = 'f32[8,32]{1,0:T(8,128)}', space=vmem, size = 0x1000, scoped, tag = 'scratch operand']
  #allocation3 [shape = 'f32[1,32]{1,0:T(1,128)}', space=vmem, size = 0x200, scoped, tag = 'scratch operand']
  #allocation4 [shape = 'f32[1,32]{1,0:T(1,128)}', space=vmem, size = 0x200, scoped, tag = 'scratch operand']
  #allocation5 [shape = 'f32[1,32]{1,0:T(1,128)}', space=vmem, size = 0x200, scoped, tag = 'scratch operand']
  %s0 = inlined_call_operand.vmem [shape: bf16[8,16], index: 0, kind: input, shape index: {}]
  %s1 = inlined_call_operand.hbm [shape: bf16[16,32], index: 1, kind: input, shape index: {}]
  %s2 = inlined_call_operand.vmem [shape: f32[1,32], index: 2, kind: input, shape index: {}]
  %s3 = inlined_call_operand.hbm [shape: f32[1,32], index: 3, kind: input, shape index: {}]
  %s4 = inlined_call_operand.vmem [shape: bf16[32,32], index: 4, kind: input, shape index: {}]
  %s5 = inlined_call_operand.hbm [shape: f32[1,32], index: 5, kind: input, shape index: {}]
  %s6 = inlined_call_operand.hbm [shape: f32[1,32], index: 6, kind: input, shape index: {}]
  %s7 = inlined_call_operand.vmem [shape: bf16[32,32], index: 7, kind: input, shape index: {}]
  %s8 = inlined_call_operand.hbm [shape: f32[1,32], index: 8, kind: input, shape index: {}]
  %s9 = inlined_call_operand.hbm [shape: f32[1,32], index: 9, kind: input, shape index: {}]
  %s10 = inlined_call_operand.hbm [shape: bf16[32,1024], index: 10, kind: input, shape index: {}]
  %s11 = inlined_call_operand.vmem [shape: f32[1,1024], index: 11, kind: input, shape index: {}]
  %s12 = inlined_call_operand.hbm [shape: bf16[1024,128], index: 12, kind: input, shape index: {}]
  %s13 = inlined_call_operand.vmem [shape: f32[1,128], index: 13, kind: input, shape index: {}]
  %s14 = inlined_call_operand.hbm [shape: f32[8,128], index: 14, kind: output, shape index: {}]
  %s15 = sld [smem:[#allocation0]]
  $region161: #{backbone_forward.1} parent=0
    _
  %s17 = ssub.s32 1, %s15
  %s18 = scalar_select 0, %s17, %s15
  $region1: #{backbone_forward.1} parent=0
    #allocation6 [shape = 'u8[4096]{0}', space=vmem, size = 0x1000, scoped, tag = 'input window, operand 1, single buffered']
    #allocation7 [shape = 's32[2]{0}', space=sflag, size = 0x8, scoped, tag = 'scoped memory for backbone_forward.1']
    #allocation8 [shape = 's32[2]{0}', space=sflag, size = 0x8, scoped, tag = 'scoped memory for backbone_forward.1']
    #allocation9 [shape = 'u8[512]{0}', space=vmem, size = 0x400, scoped, tag = 'input window, operand 3, single buffered']
    #allocation10 [shape = 's32[1]{0}', space=sflag, size = 0x4, scoped, tag = 'scoped memory for backbone_forward.1']
    #allocation11 [shape = 'u8[512]{0}', space=vmem, size = 0x400, scoped, tag = 'input window, operand 5, single buffered']
    #allocation12 [shape = 'u8[512]{0}', space=vmem, size = 0x400, scoped, tag = 'input window, operand 6, single buffered']
    #allocation13 [shape = 's32[1]{0}', space=sflag, size = 0x4, scoped, tag = 'scoped memory for backbone_forward.1']
    #allocation14 [shape = 'u8[512]{0}', space=vmem, size = 0x400, scoped, tag = 'input window, operand 8, single buffered']
    #allocation15 [shape = 'u8[512]{0}', space=vmem, size = 0x400, scoped, tag = 'input window, operand 9, single buffered']
    #allocation16 [shape = 's32[1]{0}', space=sflag, size = 0x4, scoped, tag = 'scoped memory for backbone_forward.1']
    #allocation17 [shape = 'u8[65536]{0}', space=vmem, size = 0x10000, scoped, tag = 'input window, operand 10, single buffered']
    #allocation18 [shape = 'u8[262144]{0}', space=vmem, size = 0x40000, scoped, tag = 'input window, operand 12, single buffered']
    #allocation19 [shape = 's32[1]{0}', space=sflag, size = 0x4, scoped, tag = 'scoped memory for backbone_forward.1']
    #allocation20 [shape = 'u8[8192]{0}', space=vmem, size = 0x2000, scoped, tag = 'output window, operand 0']
    %19 = vsyncpa [#allocation7], 0
    %20 = vsyncpa [#allocation10], 0
    %21 = vsyncpa [#allocation13], 0
    %22 = vsyncpa [#allocation16], 0
    %23 = vsyncpa [#allocation19], 0
    %24 = vsyncpa [#allocation8], 0
    %s25 = scalar_lea.sflag [#allocation8], 1
    %26 = vsyncpa %s25, 0
    loop: start=0, step=1, limit=6
    $region2: #{backbone_forward.1} parent=1 // loop_pre_header
      _
    $region3: #{backbone_forward.1} parent=1 // loop_header
      %s28 = sphi 0, %s32
      %p29 = scmp.ge.s32.totalorder %s28, 6
      %s35 = sphi 0, %s47
      %s36 = sphi 0, %s43
      %s37 = sphi 0, %s35
      %s38 = sphi 0, %s36
      %s39 = sphi 0, %s37
      %s40 = sphi 0, %s38
      %s54 = sphi 0, %s56
      %s57 = sphi 0, %s54
      %s58 = sphi 0, %s57
      %s74 = sphi 0, %s58
      %s78 = sphi 0, %s78
      %s80 = sphi 0, %s78
      %s81 = sphi 0, %s80
      %s95 = sphi 0, %s81
      %s99 = sphi 0, %s99
      %s101 = sphi 0, %s99
      %s102 = sphi 0, %s101
      %s116 = sphi 0, %s102
      %s120 = sphi 0, %s120
      %s122 = sphi 0, %s120
      %s123 = sphi 0, %s122
      %s137 = sphi 0, %s123
      %s141 = sphi 0, %s141
      %s143 = sphi 0, %s141
      %s144 = sphi 0, %s143
      %s158 = sphi 0, %s144
      %s162 = sphi 0, %s162
      %s164 = sphi 0, %s162
      %s165 = sphi 0, %s164
      %s179 = sphi 0, %s165
      %s183 = sphi 0, %s183
      %s185 = sphi 0, %s183
      %s186 = sphi 0, %s185
      %s200 = sphi 0, %s186
      %s204 = sphi 0, %s204
      %s206 = sphi 0, %s204
      %s207 = sphi 0, %s206
      %s221 = sphi 0, %s207
      %s225 = sphi 0, %s225
      %s227 = sphi 0, %s225
      %s228 = sphi 0, %s227
      %s242 = sphi 0, %s228
      %s246 = sphi 0, %s246
      %s248 = sphi 0, %s246
      %s249 = sphi 0, %s248
      %s263 = sphi 0, %s249
      %s267 = sphi 0, %s267
      %s269 = sphi 0, %s267
      %s270 = sphi 0, %s269
      %s284 = sphi 0, %s270
      %s288 = sphi 0, %s288
      %s290 = sphi 0, %s288
      %s291 = sphi 0, %s290
      %s305 = sphi 0, %s291
      %s309 = sphi 0, %s309
      %s311 = sphi 0, %s309
      %s312 = sphi 0, %s311
      %s326 = sphi 0, %s312
      %s330 = sphi 0, %s330
      %s332 = sphi 0, %s330
      %s333 = sphi 0, %s332
      %s347 = sphi 0, %s333
      %s357 = sphi 0, %s359
      %s360 = sphi 0, %s357
      %s361 = sphi 0, %s360
      %s377 = sphi 0, %s361
    $region4: #{backbone_forward.1} parent=1 // loop_header_branch
      %31 = sbr.rel (%p29) target = $region8
    $region5: #{backbone_forward.1} parent=1 // loop_body
      %s33 = ssub.s32 %s28, 1
      %s34 = ssub.s32 %s28, 2
      %s41 = sadd.s32 1, %s36
      %p42 = scmp.ge.s32.totalorder %s41, 1
      %s43 = scalar_select %p42, 0, %s41
      %s44 = sadd.s32 1, %s35
      %s45 = scalar_select %p42, %s44, %s35
      %p46 = scmp.ge.s32.totalorder %s45, 4
      %s47 = scalar_select %p46, 0, %s45
      %p48 = scmp.eq.s32.totalorder %s35, 0
      %s49 = scalar_select %p48, %s36, 0
      %p50 = scmp.eq.s32.totalorder %s47, 0
      %s51 = scalar_select %p50, %s43, 0
      %s52 = ssub.s32 %s49, %s51
      %p53 = scmp.eq.s32.totalorder %s52, 0
      %s55 = sadd.s32 %s54, 1
      %s56 = scalar_select %p53, %s54, %s55
      %p59 = pneg %p53
      %p60 = scmp.eq.s32.totalorder %s28, 3
      %p61 = por %p59, %p60
      %p62 = scmp.ne.s32.totalorder %s54, %s57
      %p63 = scmp.eq.s32.totalorder %s28, 0
      %p64 = por %p62, %p63
      %p65 = scmp.ne.s32.totalorder %s54, %s57
      %p66 = scmp.eq.s32.totalorder %s33, 3
      %p67 = por %p65, %p66
      %p68 = scmp.ne.s32.totalorder %s57, %s58
      %p69 = scmp.eq.s32.totalorder %s33, 0
      %p70 = por %p68, %p69
      %p71 = scmp.ne.s32.totalorder %s57, %s58
      %p72 = scmp.eq.s32.totalorder %s34, 3
      %p73 = por %p71, %p72
      %p75 = scmp.ne.s32.totalorder %s58, %s74
      %p76 = scmp.eq.s32.totalorder %s34, 0
      %p77 = por %p75, %p76
      %s79 = sadd.s32 %s78, 1
      %p82 = scmp.eq.s32.totalorder %s28, 3
      %p83 = scmp.ne.s32.totalorder %s78, %s80
      %p84 = scmp.eq.s32.totalorder %s28, 0
      %p85 = por %p83, %p84
      %p86 = scmp.ne.s32.totalorder %s78, %s80
      %p87 = scmp.eq.s32.totalorder %s33, 3
      %p88 = por %p86, %p87
      %p89 = scmp.ne.s32.totalorder %s80, %s81
      %p90 = scmp.eq.s32.totalorder %s33, 0
      %p91 = por %p89, %p90
      %p92 = scmp.ne.s32.totalorder %s80, %s81
      %p93 = scmp.eq.s32.totalorder %s34, 3
      %p94 = por %p92, %p93
      %p96 = scmp.ne.s32.totalorder %s81, %s95
      %p97 = scmp.eq.s32.totalorder %s34, 0
      %p98 = por %p96, %p97
      %s100 = sadd.s32 %s99, 1
      %p103 = scmp.eq.s32.totalorder %s28, 3
      %p104 = scmp.ne.s32.totalorder %s99, %s101
      %p105 = scmp.eq.s32.totalorder %s28, 0
      %p106 = por %p104, %p105
      %p107 = scmp.ne.s32.totalorder %s99, %s101
      %p108 = scmp.eq.s32.totalorder %s33, 3
      %p109 = por %p107, %p108
      %p110 = scmp.ne.s32.totalorder %s101, %s102
      %p111 = scmp.eq.s32.totalorder %s33, 0
      %p112 = por %p110, %p111
      %p113 = scmp.ne.s32.totalorder %s101, %s102
      %p114 = scmp.eq.s32.totalorder %s34, 3
      %p115 = por %p113, %p114
      %p117 = scmp.ne.s32.totalorder %s102, %s116
      %p118 = scmp.eq.s32.totalorder %s34, 0
      %p119 = por %p117, %p118
      %s121 = sadd.s32 %s120, 1
      %p124 = scmp.eq.s32.totalorder %s28, 3
      %p125 = scmp.ne.s32.totalorder %s120, %s122
      %p126 = scmp.eq.s32.totalorder %s28, 0
      %p127 = por %p125, %p126
      %p128 = scmp.ne.s32.totalorder %s120, %s122
      %p129 = scmp.eq.s32.totalorder %s33, 3
      %p130 = por %p128, %p129
      %p131 = scmp.ne.s32.totalorder %s122, %s123
      %p132 = scmp.eq.s32.totalorder %s33, 0
      %p133 = por %p131, %p132
      %p134 = scmp.ne.s32.totalorder %s122, %s123
      %p135 = scmp.eq.s32.totalorder %s34, 3
      %p136 = por %p134, %p135
      %p138 = scmp.ne.s32.totalorder %s123, %s137
      %p139 = scmp.eq.s32.totalorder %s34, 0
      %p140 = por %p138, %p139
      %s142 = sadd.s32 %s141, 1
      %p145 = scmp.eq.s32.totalorder %s28, 3
      %p146 = scmp.ne.s32.totalorder %s141, %s143
      %p147 = scmp.eq.s32.totalorder %s28, 0
      %p148 = por %p146, %p147
      %p149 = scmp.ne.s32.totalorder %s141, %s143
      %p150 = scmp.eq.s32.totalorder %s33, 3
      %p151 = por %p149, %p150
      %p152 = scmp.ne.s32.totalorder %s143, %s144
      %p153 = scmp.eq.s32.totalorder %s33, 0
      %p154 = por %p152, %p153
      %p155 = scmp.ne.s32.totalorder %s143, %s144
      %p156 = scmp.eq.s32.totalorder %s34, 3
      %p157 = por %p155, %p156
      %p159 = scmp.ne.s32.totalorder %s144, %s158
      %p160 = scmp.eq.s32.totalorder %s34, 0
      %p161 = por %p159, %p160
      %s163 = sadd.s32 %s162, 1
      %p166 = scmp.eq.s32.totalorder %s28, 3
      %p167 = scmp.ne.s32.totalorder %s162, %s164
      %p168 = scmp.eq.s32.totalorder %s28, 0
      %p169 = por %p167, %p168
      %p170 = scmp.ne.s32.totalorder %s162, %s164
      %p171 = scmp.eq.s32.totalorder %s33, 3
      %p172 = por %p170, %p171
      %p173 = scmp.ne.s32.totalorder %s164, %s165
      %p174 = scmp.eq.s32.totalorder %s33, 0
      %p175 = por %p173, %p174
      %p176 = scmp.ne.s32.totalorder %s164, %s165
      %p177 = scmp.eq.s32.totalorder %s34, 3
      %p178 = por %p176, %p177
      %p180 = scmp.ne.s32.totalorder %s165, %s179
      %p181 = scmp.eq.s32.totalorder %s34, 0
      %p182 = por %p180, %p181
      %s184 = sadd.s32 %s183, 1
      %p187 = scmp.eq.s32.totalorder %s28, 3
      %p188 = scmp.ne.s32.totalorder %s183, %s185
      %p189 = scmp.eq.s32.totalorder %s28, 0
      %p190 = por %p188, %p189
      %p191 = scmp.ne.s32.totalorder %s183, %s185
      %p192 = scmp.eq.s32.totalorder %s33, 3
      %p193 = por %p191, %p192
      %p194 = scmp.ne.s32.totalorder %s185, %s186
      %p195 = scmp.eq.s32.totalorder %s33, 0
      %p196 = por %p194, %p195
      %p197 = scmp.ne.s32.totalorder %s185, %s186
      %p198 = scmp.eq.s32.totalorder %s34, 3
      %p199 = por %p197, %p198
      %p201 = scmp.ne.s32.totalorder %s186, %s200
      %p202 = scmp.eq.s32.totalorder %s34, 0
      %p203 = por %p201, %p202
      %s205 = sadd.s32 %s204, 1
      %p208 = scmp.eq.s32.totalorder %s28, 3
      %p209 = scmp.ne.s32.totalorder %s204, %s206
      %p210 = scmp.eq.s32.totalorder %s28, 0
      %p211 = por %p209, %p210
      %p212 = scmp.ne.s32.totalorder %s204, %s206
      %p213 = scmp.eq.s32.totalorder %s33, 3
      %p214 = por %p212, %p213
      %p215 = scmp.ne.s32.totalorder %s206, %s207
      %p216 = scmp.eq.s32.totalorder %s33, 0
      %p217 = por %p215, %p216
      %p218 = scmp.ne.s32.totalorder %s206, %s207
      %p219 = scmp.eq.s32.totalorder %s34, 3
      %p220 = por %p218, %p219
      %p222 = scmp.ne.s32.totalorder %s207, %s221
      %p223 = scmp.eq.s32.totalorder %s34, 0
      %p224 = por %p222, %p223
      %s226 = sadd.s32 %s225, 1
      %p229 = scmp.eq.s32.totalorder %s28, 3
      %p230 = scmp.ne.s32.totalorder %s225, %s227
      %p231 = scmp.eq.s32.totalorder %s28, 0
      %p232 = por %p230, %p231
      %p233 = scmp.ne.s32.totalorder %s225, %s227
      %p234 = scmp.eq.s32.totalorder %s33, 3
      %p235 = por %p233, %p234
      %p236 = scmp.ne.s32.totalorder %s227, %s228
      %p237 = scmp.eq.s32.totalorder %s33, 0
      %p238 = por %p236, %p237
      %p239 = scmp.ne.s32.totalorder %s227, %s228
      %p240 = scmp.eq.s32.totalorder %s34, 3
      %p241 = por %p239, %p240
      %p243 = scmp.ne.s32.totalorder %s228, %s242
      %p244 = scmp.eq.s32.totalorder %s34, 0
      %p245 = por %p243, %p244
      %s247 = sadd.s32 %s246, 1
      %p250 = scmp.eq.s32.totalorder %s28, 3
      %p251 = scmp.ne.s32.totalorder %s246, %s248
      %p252 = scmp.eq.s32.totalorder %s28, 0
      %p253 = por %p251, %p252
      %p254 = scmp.ne.s32.totalorder %s246, %s248
      %p255 = scmp.eq.s32.totalorder %s33, 3
      %p256 = por %p254, %p255
      %p257 = scmp.ne.s32.totalorder %s248, %s249
      %p258 = scmp.eq.s32.totalorder %s33, 0
      %p259 = por %p257, %p258
      %p260 = scmp.ne.s32.totalorder %s248, %s249
      %p261 = scmp.eq.s32.totalorder %s34, 3
      %p262 = por %p260, %p261
      %p264 = scmp.ne.s32.totalorder %s249, %s263
      %p265 = scmp.eq.s32.totalorder %s34, 0
      %p266 = por %p264, %p265
      %s268 = sadd.s32 %s267, 1
      %p271 = scmp.eq.s32.totalorder %s28, 3
      %p272 = scmp.ne.s32.totalorder %s267, %s269
      %p273 = scmp.eq.s32.totalorder %s28, 0
      %p274 = por %p272, %p273
      %p275 = scmp.ne.s32.totalorder %s267, %s269
      %p276 = scmp.eq.s32.totalorder %s33, 3
      %p277 = por %p275, %p276
      %p278 = scmp.ne.s32.totalorder %s269, %s270
      %p279 = scmp.eq.s32.totalorder %s33, 0
      %p280 = por %p278, %p279
      %p281 = scmp.ne.s32.totalorder %s269, %s270
      %p282 = scmp.eq.s32.totalorder %s34, 3
      %p283 = por %p281, %p282
      %p285 = scmp.ne.s32.totalorder %s270, %s284
      %p286 = scmp.eq.s32.totalorder %s34, 0
      %p287 = por %p285, %p286
      %s289 = sadd.s32 %s288, 1
      %p292 = scmp.eq.s32.totalorder %s28, 3
      %p293 = scmp.ne.s32.totalorder %s288, %s290
      %p294 = scmp.eq.s32.totalorder %s28, 0
      %p295 = por %p293, %p294
      %p296 = scmp.ne.s32.totalorder %s288, %s290
      %p297 = scmp.eq.s32.totalorder %s33, 3
      %p298 = por %p296, %p297
      %p299 = scmp.ne.s32.totalorder %s290, %s291
      %p300 = scmp.eq.s32.totalorder %s33, 0
      %p301 = por %p299, %p300
      %p302 = scmp.ne.s32.totalorder %s290, %s291
      %p303 = scmp.eq.s32.totalorder %s34, 3
      %p304 = por %p302, %p303
      %p306 = scmp.ne.s32.totalorder %s291, %s305
      %p307 = scmp.eq.s32.totalorder %s34, 0
      %p308 = por %p306, %p307
      %s310 = sadd.s32 %s309, 1
      %p313 = scmp.eq.s32.totalorder %s28, 3
      %p314 = scmp.ne.s32.totalorder %s309, %s311
      %p315 = scmp.eq.s32.totalorder %s28, 0
      %p316 = por %p314, %p315
      %p317 = scmp.ne.s32.totalorder %s309, %s311
      %p318 = scmp.eq.s32.totalorder %s33, 3
      %p319 = por %p317, %p318
      %p320 = scmp.ne.s32.totalorder %s311, %s312
      %p321 = scmp.eq.s32.totalorder %s33, 0
      %p322 = por %p320, %p321
      %p323 = scmp.ne.s32.totalorder %s311, %s312
      %p324 = scmp.eq.s32.totalorder %s34, 3
      %p325 = por %p323, %p324
      %p327 = scmp.ne.s32.totalorder %s312, %s326
      %p328 = scmp.eq.s32.totalorder %s34, 0
      %p329 = por %p327, %p328
      %s331 = sadd.s32 %s330, 1
      %p334 = scmp.eq.s32.totalorder %s28, 3
      %p335 = scmp.ne.s32.totalorder %s330, %s332
      %p336 = scmp.eq.s32.totalorder %s28, 0
      %p337 = por %p335, %p336
      %p338 = scmp.ne.s32.totalorder %s330, %s332
      %p339 = scmp.eq.s32.totalorder %s33, 3
      %p340 = por %p338, %p339
      %p341 = scmp.ne.s32.totalorder %s332, %s333
      %p342 = scmp.eq.s32.totalorder %s33, 0
      %p343 = por %p341, %p342
      %p344 = scmp.ne.s32.totalorder %s332, %s333
      %p345 = scmp.eq.s32.totalorder %s34, 3
      %p346 = por %p344, %p345
      %p348 = scmp.ne.s32.totalorder %s333, %s347
      %p349 = scmp.eq.s32.totalorder %s34, 0
      %p350 = por %p348, %p349
      %p351 = scmp.eq.s32.totalorder %s35, 3
      %s352 = scalar_select %p351, %s36, 0
      %p353 = scmp.eq.s32.totalorder %s47, 3
      %s354 = scalar_select %p353, %s43, 0
      %s355 = ssub.s32 %s352, %s354
      %p356 = scmp.eq.s32.totalorder %s355, 0
      %s358 = sadd.s32 %s357, 1
      %s359 = scalar_select %p356, %s357, %s358
      %p362 = pneg %p356
      %p363 = scmp.eq.s32.totalorder %s28, 3
      %p364 = por %p362, %p363
      %p365 = scmp.ne.s32.totalorder %s357, %s360
      %p366 = scmp.eq.s32.totalorder %s28, 0
      %p367 = por %p365, %p366
      %p368 = scmp.ne.s32.totalorder %s357, %s360
      %p369 = scmp.eq.s32.totalorder %s33, 3
      %p370 = por %p368, %p369
      %p371 = scmp.ne.s32.totalorder %s360, %s361
      %p372 = scmp.eq.s32.totalorder %s33, 0
      %p373 = por %p371, %p372
      %p374 = scmp.ne.s32.totalorder %s360, %s361
      %p375 = scmp.eq.s32.totalorder %s34, 3
      %p376 = por %p374, %p375
      %p378 = scmp.ne.s32.totalorder %s361, %s377
      %p379 = scmp.eq.s32.totalorder %s34, 0
      %p380 = por %p378, %p379
      %p381 = scmp.le.s32.totalorder 1, %s28
      %p382 = scmp.lt.s32.totalorder %s28, 5
      %p383 = pnand %p381, %p382
      %p384 = pneg %p383
      // Predicated region
      $region9: #{backbone_forward.1} parent=5 // pred_check
        _
      $region10: #{backbone_forward.1} parent=5 // pred_check_branch
        %386 = sbr.rel (%p383) target = $region12
      $region11: #{backbone_forward.1} parent=5 // pred_region
        %s387 = ssub.s32 %s28, 1
        // Predicated region
        $region13: #{backbone_forward.1} parent=11 // pred_check
          %p388 = pneg %p91
        $region14: #{backbone_forward.1} parent=11 // pred_check_branch
          %390 = sbr.rel (%p388) target = $region16
        $region15: #{backbone_forward.1} parent=11 // pred_region
          %s392 = ssub.s32 128, 128
          %393 = vsyncadd [#allocation7], %s392
          %s394 = sshll.u32 [#allocation6], 4
          %s395 = int_to_ptr.vmem [resolvable:$true] %s394
          %400 = dma.hbm_to_vmem [thread:$0]  %s1, 128, %s395, [#allocation7], 64, 64, 4
        $region16: #{backbone_forward.1} parent=11 // pred_fallthru
          _
        // Predicated region
        $region17: #{backbone_forward.1} parent=11 // pred_check
          %p401 = pneg %p112
        $region18: #{backbone_forward.1} parent=11 // pred_check_branch
          %403 = sbr.rel (%p401) target = $region20
        $region19: #{backbone_forward.1} parent=11 // pred_region
          _
        $region20: #{backbone_forward.1} parent=11 // pred_fallthru
          _
        // Predicated region
        $region21: #{backbone_forward.1} parent=11 // pred_check
          %p404 = pneg %p133
        $region22: #{backbone_forward.1} parent=11 // pred_check_branch
          %406 = sbr.rel (%p404) target = $region24
        $region23: #{backbone_forward.1} parent=11 // pred_region
          %s408 = ssub.s32 16, 16
          %409 = vsyncadd [#allocation10], %s408
          %s411 = sshll.u32 [#allocation9], 4
          %s412 = int_to_ptr.vmem [resolvable:$true] %s411
          %414 = dma.hbm_to_vmem [thread:$0]  %s3, 16, %s412, [#allocation10]
        $region24: #{backbone_forward.1} parent=11 // pred_fallthru
          _
        // Predicated region
        $region25: #{backbone_forward.1} parent=11 // pred_check
          %p415 = pneg %p154
        $region26: #{backbone_forward.1} parent=11 // pred_check_branch
          %417 = sbr.rel (%p415) target = $region28
        $region27: #{backbone_forward.1} parent=11 // pred_region
          _
        $region28: #{backbone_forward.1} parent=11 // pred_fallthru
          _
        // Predicated region
        $region29: #{backbone_forward.1} parent=11 // pred_check
          %p418 = pneg %p175
        $region30: #{backbone_forward.1} parent=11 // pred_check_branch
          %420 = sbr.rel (%p418) target = $region32
        $region31: #{backbone_forward.1} parent=11 // pred_region
          %s422 = ssub.s32 16, 16
          %423 = vsyncadd [#allocation10], %s422
          %s425 = sshll.u32 [#allocation11], 4
          %s426 = int_to_ptr.vmem [resolvable:$true] %s425
          %428 = dma.hbm_to_vmem [thread:$0]  %s5, 16, %s426, [#allocation10]
        $region32: #{backbone_forward.1} parent=11 // pred_fallthru
          _
        // Predicated region
        $region33: #{backbone_forward.1} parent=11 // pred_check
          %p429 = pneg %p196
        $region34: #{backbone_forward.1} parent=11 // pred_check_branch
          %431 = sbr.rel (%p429) target = $region36
        $region35: #{backbone_forward.1} parent=11 // pred_region
          %s433 = ssub.s32 16, 16
          %434 = vsyncadd [#allocation13], %s433
          %s436 = sshll.u32 [#allocation12], 4
          %s437 = int_to_ptr.vmem [resolvable:$true] %s436
          %439 = dma.hbm_to_vmem [thread:$0]  %s6, 16, %s437, [#allocation13]
        $region36: #{backbone_forward.1} parent=11 // pred_fallthru
          _
        // Predicated region
        $region37: #{backbone_forward.1} parent=11 // pred_check
          %p440 = pneg %p217
        $region38: #{backbone_forward.1} parent=11 // pred_check_branch
          %442 = sbr.rel (%p440) target = $region40
        $region39: #{backbone_forward.1} parent=11 // pred_region
          _
        $region40: #{backbone_forward.1} parent=11 // pred_fallthru
          _
        // Predicated region
        $region41: #{backbone_forward.1} parent=11 // pred_check
          %p443 = pneg %p238
        $region42: #{backbone_forward.1} parent=11 // pred_check_branch
          %445 = sbr.rel (%p443) target = $region44
        $region43: #{backbone_forward.1} parent=11 // pred_region
          %s447 = ssub.s32 16, 16
          %448 = vsyncadd [#allocation13], %s447
          %s450 = sshll.u32 [#allocation14], 4
          %s451 = int_to_ptr.vmem [resolvable:$true] %s450
          %453 = dma.hbm_to_vmem [thread:$0]  %s8, 16, %s451, [#allocation13]
        $region44: #{backbone_forward.1} parent=11 // pred_fallthru
          _
        // Predicated region
        $region45: #{backbone_forward.1} parent=11 // pred_check
          %p454 = pneg %p259
        $region46: #{backbone_forward.1} parent=11 // pred_check_branch
          %456 = sbr.rel (%p454) target = $region48
        $region47: #{backbone_forward.1} parent=11 // pred_region
          %s458 = ssub.s32 16, 16
          %459 = vsyncadd [#allocation16], %s458
          %s461 = sshll.u32 [#allocation15], 4
          %s462 = int_to_ptr.vmem [resolvable:$true] %s461
          %464 = dma.hbm_to_vmem [thread:$0]  %s9, 16, %s462, [#allocation16]
        $region48: #{backbone_forward.1} parent=11 // pred_fallthru
          _
        // Predicated region
        $region49: #{backbone_forward.1} parent=11 // pred_check
          %p465 = pneg %p280
        $region50: #{backbone_forward.1} parent=11 // pred_check_branch
          %467 = sbr.rel (%p465) target = $region52
        $region51: #{backbone_forward.1} parent=11 // pred_region
          %s469 = ssub.s32 2048, 2048
          %470 = vsyncadd [#allocation16], %s469
          %s471 = sshll.u32 [#allocation17], 4
          %s472 = int_to_ptr.vmem [resolvable:$true] %s471
          %477 = dma.hbm_to_vmem [thread:$0]  %s10, 2048, %s472, [#allocation16], 512, 512, 32
        $region52: #{backbone_forward.1} parent=11 // pred_fallthru
          _
        // Predicated region
        $region53: #{backbone_forward.1} parent=11 // pred_check
          %p478 = pneg %p301
        $region54: #{backbone_forward.1} parent=11 // pred_check_branch
          %480 = sbr.rel (%p478) target = $region56
        $region55: #{backbone_forward.1} parent=11 // pred_region
          _
        $region56: #{backbone_forward.1} parent=11 // pred_fallthru
          _
        // Predicated region
        $region57: #{backbone_forward.1} parent=11 // pred_check
          %p481 = pneg %p322
        $region58: #{backbone_forward.1} parent=11 // pred_check_branch
          %483 = sbr.rel (%p481) target = $region60
        $region59: #{backbone_forward.1} parent=11 // pred_region
          %s485 = ssub.s32 8192, 8192
          %486 = vsyncadd [#allocation19], %s485
          %s487 = sshll.u32 [#allocation18], 4
          %s488 = int_to_ptr.vmem [resolvable:$true] %s487
          %493 = dma.hbm_to_vmem [thread:$0]  %s12, 8192, %s488, [#allocation19], 64, 64, 4
        $region60: #{backbone_forward.1} parent=11 // pred_fallthru
          _
        // Predicated region
        $region61: #{backbone_forward.1} parent=11 // pred_check
          %p494 = pneg %p343
        $region62: #{backbone_forward.1} parent=11 // pred_check_branch
          %496 = sbr.rel (%p494) target = $region64
        $region63: #{backbone_forward.1} parent=11 // pred_region
          _
        $region64: #{backbone_forward.1} parent=11 // pred_fallthru
          _
      $region12: #{backbone_forward.1} parent=5 // pred_fallthru
        _
      %p497 = scmp.lt.s32.totalorder %s28, 4
      // Predicated region
      $region65: #{backbone_forward.1} parent=5 // pred_check
        %p498 = pneg %p497
      $region66: #{backbone_forward.1} parent=5 // pred_check_branch
        %500 = sbr.rel (%p498) target = $region68
      $region67: #{backbone_forward.1} parent=5 // pred_region
        // Predicated region
        $region69: #{backbone_forward.1} parent=67 // pred_check
          %p501 = pneg %p64
        $region70: #{backbone_forward.1} parent=67 // pred_check_branch
          %503 = sbr.rel (%p501) target = $region72
        $region71: #{backbone_forward.1} parent=67 // pred_region
          %p504 = scmp.eq.s32.totalorder %s35, 0
          %s505 = scalar_select %p504, %s36, 0
          %p506 = scmp.lt.s32.totalorder %s505, 0
          %s507 = scalar_select %p506, %s505, 0
          %s508 = smul.addr %s507, 4
          %s509 = scalar_lea.vmem %s0, %s508
          %p510 = scmp.eq.s32.totalorder %s35, 0
          %s511 = scalar_select %p510, %s36, 0
        $region72: #{backbone_forward.1} parent=67 // pred_fallthru
          _
      $region68: #{backbone_forward.1} parent=5 // pred_fallthru
        _
      %p512 = scmp.le.s32.totalorder 1, %s28
      %p513 = scmp.lt.s32.totalorder %s28, 5
      %p514 = pnand %p512, %p513
      %p515 = pneg %p514
      // Predicated region
      $region73: #{backbone_forward.1} parent=5 // pred_check
        _
      $region74: #{backbone_forward.1} parent=5 // pred_check_branch
        %517 = sbr.rel (%p514) target = $region76
      $region75: #{backbone_forward.1} parent=5 // pred_region
        %s518 = ssub.s32 %s28, 1
        // Predicated region
        $region77: #{backbone_forward.1} parent=75 // pred_check
          %p519 = pneg %p91
        $region78: #{backbone_forward.1} parent=75 // pred_check_branch
          %521 = sbr.rel (%p519) target = $region80
        $region79: #{backbone_forward.1} parent=75 // pred_region
          %522 = dma.done [#allocation7], 128
        $region80: #{backbone_forward.1} parent=75 // pred_fallthru
          _
        // Predicated region
        $region81: #{backbone_forward.1} parent=75 // pred_check
          %p523 = pneg %p133
        $region82: #{backbone_forward.1} parent=75 // pred_check_branch
          %525 = sbr.rel (%p523) target = $region84
        $region83: #{backbone_forward.1} parent=75 // pred_region
          %526 = dma.done [#allocation10], 16
        $region84: #{backbone_forward.1} parent=75 // pred_fallthru
          _
        // Predicated region
        $region85: #{backbone_forward.1} parent=75 // pred_check
          %p527 = pneg %p175
        $region86: #{backbone_forward.1} parent=75 // pred_check_branch
          %529 = sbr.rel (%p527) target = $region88
        $region87: #{backbone_forward.1} parent=75 // pred_region
          %530 = dma.done [#allocation10], 16
        $region88: #{backbone_forward.1} parent=75 // pred_fallthru
          _
        // Predicated region
        $region89: #{backbone_forward.1} parent=75 // pred_check
          %p531 = pneg %p196
        $region90: #{backbone_forward.1} parent=75 // pred_check_branch
          %533 = sbr.rel (%p531) target = $region92
        $region91: #{backbone_forward.1} parent=75 // pred_region
          %534 = dma.done [#allocation13], 16
        $region92: #{backbone_forward.1} parent=75 // pred_fallthru
          _
        // Predicated region
        $region93: #{backbone_forward.1} parent=75 // pred_check
          %p535 = pneg %p238
        $region94: #{backbone_forward.1} parent=75 // pred_check_branch
          %537 = sbr.rel (%p535) target = $region96
        $region95: #{backbone_forward.1} parent=75 // pred_region
          %538 = dma.done [#allocation13], 16
        $region96: #{backbone_forward.1} parent=75 // pred_fallthru
          _
        // Predicated region
        $region97: #{backbone_forward.1} parent=75 // pred_check
          %p539 = pneg %p259
        $region98: #{backbone_forward.1} parent=75 // pred_check_branch
          %541 = sbr.rel (%p539) target = $region100
        $region99: #{backbone_forward.1} parent=75 // pred_region
          %542 = dma.done [#allocation16], 16
        $region100: #{backbone_forward.1} parent=75 // pred_fallthru
          _
        // Predicated region
        $region101: #{backbone_forward.1} parent=75 // pred_check
          %p543 = pneg %p280
        $region102: #{backbone_forward.1} parent=75 // pred_check_branch
          %545 = sbr.rel (%p543) target = $region104
        $region103: #{backbone_forward.1} parent=75 // pred_region
          %546 = dma.done [#allocation16], 2048
        $region104: #{backbone_forward.1} parent=75 // pred_fallthru
          _
        // Predicated region
        $region105: #{backbone_forward.1} parent=75 // pred_check
          %p547 = pneg %p322
        $region106: #{backbone_forward.1} parent=75 // pred_check_branch
          %549 = sbr.rel (%p547) target = $region108
        $region107: #{backbone_forward.1} parent=75 // pred_region
          %550 = dma.done [#allocation19], 8192
        $region108: #{backbone_forward.1} parent=75 // pred_fallthru
          _
        %p551 = scmp.eq.s32.totalorder %s37, 0
        %s552 = scalar_select %p551, %s38, 0
        %p553 = scmp.lt.s32.totalorder %s552, 0
        %s554 = scalar_select %p553, %s552, 0
        %s555 = smul.addr %s554, 4
        %s556 = scalar_lea.vmem %s0, %s555
        %p557 = pneg %p70
        %p558 = pneg %p67
        %p559 = pneg %p91
        %p560 = pneg %p88
        %p561 = pneg %p112
        %p562 = pneg %p109
        %p563 = pneg %p133
        %p564 = pneg %p130
        %p565 = pneg %p154
        %p566 = pneg %p151
        %p567 = pneg %p175
        %p568 = pneg %p172
        %p569 = pneg %p196
        %p570 = pneg %p193
        %p571 = pneg %p217
        %p572 = pneg %p214
        %p573 = pneg %p238
        %p574 = pneg %p235
        %p575 = pneg %p259
        %p576 = pneg %p256
        %p577 = pneg %p280
        %p578 = pneg %p277
        %p579 = pneg %p301
        %p580 = pneg %p298
        %p581 = pneg %p322
        %p582 = pneg %p319
        %p583 = pneg %p343
        %p584 = pneg %p340
        %p585 = pneg %p373
        %p586 = pneg %p370
        %s587 = sand.u32 %s360, 1
        %s588 = scalar_lea.sflag [#allocation8], %s587
        %s589 = sand.u32 %s360, 1
        %s590 = smul.addr %s589, 8
        %s591 = scalar_lea.vmem [#allocation20], %s590
        %p592 = scmp.eq.s32.totalorder %s37, 0
        %s593 = scalar_select %p592, %s38, 0
        %p594 = scmp.lt.s32.totalorder %s593, 0
        %s595 = scalar_select %p594, %s593, 0
        %s596 = smul.addr %s595, 4
        %s597 = scalar_lea.vmem %s0, %s596
        %p598 = scmp.eq.s32.totalorder %s37, 0
        %s599 = scalar_select %p598, %s38, 0
        %p600 = scmp.eq.s32.totalorder %s37, 3
        %s601 = scalar_select %p600, %s38, 0
        %s603 = smul.u32 %s38, 8
        %p604 = scmp.eq.s32.totalorder %s37, 0
        // Predicated region
        $region109: #{backbone_forward.1} parent=75 // pred_check
          %p605 = pneg %p604
        $region110: #{backbone_forward.1} parent=75 // pred_check_branch
          %607 = sbr.rel (%p605) target = $region112
        $region111: #{backbone_forward.1} parent=75 // pred_region
          %v608 = vld [vmem:[%s597] sm:$0xf]
          %v609 = vld [vmem:[#allocation6] sm:$0xf]
          %v610 = vld [vmem:[#allocation6 + $0x4] sm:$0xf]
          %v613 = vunpack.c.l.b16 %v609
          %v614 = vunpack.c.l.b16 %v610
          %v615 = vpack.c.b16 %v614, %v613
          %vm617 = vcmask 130048
          %v619 = vsel %vm617, %v608, 0
          %621 = vmatprep.subr.bf16.mxu0 0
          %622 = vmatpush1.bf16.msra.mxu0 %v615
          %623 = vmatprep.subr.bf16.mxu0 0
          %624 = vmatpush1.bf16.msra.mxu0 0
          %625 = vmatprep.subr.bf16.mxu0 0
          %626 = vmatpush1.bf16.msra.mxu0 0
          %627 = vmatprep.subr.bf16.mxu0 0
          %628 = vmatpush1.bf16.msra.mxu0 0
          %629 = vmatprep.subr.bf16.mxu0 0
          %630 = vmatpush1.bf16.msra.mxu0 0
          %631 = vmatprep.subr.bf16.mxu0 0
          %632 = vmatpush1.bf16.msra.mxu0 0
          %633 = vmatprep.subr.bf16.mxu0 0
          %634 = vmatpush1.bf16.msra.mxu0 0
          %635 = vmatprep.subr.bf16.mxu0 0
          %636 = vmatpush1.bf16.msra.mxu0 0
          %637 = vmatprep.subr.bf16.mxu0 0
          %638 = vmatpush1.bf16.msra.mxu0 0
          %639 = vmatprep.subr.bf16.mxu0 0
          %640 = vmatpush1.bf16.msra.mxu0 0
          %641 = vmatprep.subr.bf16.mxu0 0
          %642 = vmatpush1.bf16.msra.mxu0 0
          %643 = vmatprep.subr.bf16.mxu0 0
          %644 = vmatpush1.bf16.msra.mxu0 0
          %645 = vmatprep.subr.bf16.mxu0 0
          %646 = vmatpush1.bf16.msra.mxu0 0
          %647 = vmatprep.subr.bf16.mxu0 0
          %648 = vmatpush1.bf16.msra.mxu0 0
          %649 = vmatprep.subr.bf16.mxu0 0
          %650 = vmatpush1.bf16.msra.mxu0 0
          %651 = vmatprep.subr.bf16.mxu0 0
          %652 = vmatpush1.bf16.msra.mxu0 0
          %653 = vmatprep.mubr.bf16.mxu0 0
          %654 = vmatmul.mubr.bf16.gmra.mrb[0].mxu0 %v619
          %v655 = vpop.f32.mrb[0].mxu0
          %v656 = vadd.f32 0.0, %v655
          %v657 = vpop.f32.mrb[0].mxu0
          %v658 = vpop.f32.mrb[0].mxu0
          %v659 = vpop.f32.mrb[0].mxu0
          %660 = vdwg.mxu0
          %s661 = scalar_lea.vmem [#allocation2], %s603
          %vm662 = vcmask 261120
          %663 = vst.msk [vmem:[%s661] sm:$0xff] %vm662, %v656
          %v664 = vlaneseq
          %v665 = vshrl.u32 %v664, 7
          %v666 = vstv %s603
          %v667 = vadd.s32 %v666, %v665
          %vm668 = vcmp.lt.s32.totalorder %v667, 8
          %v669 = vsel %vm668, 1, 0
          %vm670 = vcmp.eq.s32.totalorder %v669, 1
          %v671 = vsel %vm670, %v656, 0.0
          %p672 = scmp.eq.s32.totalorder %s38, 0
          // Predicated region
          $region113: #{backbone_forward.1} parent=111 // pred_check
            %p673 = pneg %p672
          $region114: #{backbone_forward.1} parent=111 // pred_check_branch
            %675 = sbr.rel (%p673) target = $region116
          $region115: #{backbone_forward.1} parent=111 // pred_region
            %vm676 = vcmask 253952
            %677 = vst.msk [vmem:[#allocation3] sm:$0x1] %vm676, 0.0
          $region116: #{backbone_forward.1} parent=111 // pred_fallthru
            _
          %v678 = vld [vmem:[#allocation3] sm:$0x1]
          %v679 = vsel %vm662, %v671, 0.0
          %v680 = vrot.slane %v679, 4
          %v681 = vadd.f32 %v679, %v680
          %v682 = vrot.slane %v681, 2
          %v683 = vadd.f32 %v681, %v682
          %v684 = vrot.slane %v683, 1
          %v685 = vadd.f32 %v683, %v684
          %v686 = vadd.f32 %v678, %v685
          %vm687 = vcmask 253952
          %688 = vst.msk [vmem:[#allocation3] sm:$0x1] %vm687, %v686
          // Predicated region
          $region117: #{backbone_forward.1} parent=111 // pred_check
            %p689 = pneg %p672
          $region118: #{backbone_forward.1} parent=111 // pred_check_branch
            %691 = sbr.rel (%p689) target = $region120
          $region119: #{backbone_forward.1} parent=111 // pred_region
            %v692 = vld [vmem:[#allocation3] sm:$0x1]
            %v693 = vmul.f32 %v692, 0.125
            %vm694 = vcmp.lt.s32.totalorder %v665, 8
            %v695 = vld [vmem:[#allocation2] sm:$0xff]
            %v697 = vlaneseq
            %v698 = vshrl.u32 %v697, 7
            %v699 = vsub.s32 0, %v698
            %v700 = vrot.slane %v693, %v699
            %v702 = vsub.f32 %v695, %v700
            %v703 = vsel %vm694, 1, 0
            %vm704 = vcmp.eq.s32.totalorder %v703, 1
            %v705 = vsel %vm704, %v702, 0.0
            %v706 = vmul.f32 %v705, %v705
            %v707 = vsel %vm662, %v706, 0.0
            %v708 = vrot.slane %v707, 4
            %v709 = vadd.f32 %v707, %v708
            %v710 = vrot.slane %v709, 2
            %v711 = vadd.f32 %v709, %v710
            %v712 = vrot.slane %v711, 1
            %v713 = vadd.f32 %v711, %v712
            %v714 = vmul.f32 %v713, 0.125
            %v715 = vld [vmem:[%s2] sm:$0x1]
            %v716 = vadd.f32 %v714, 1e-05
            %v717 = vrsqrt.pop %v716
            %v718 = vmul.f32 %v715, %v717
            %719 = vst.msk [vmem:[#allocation4] sm:$0x1] %vm687, %v718
            %v720 = vld [vmem:[#allocation9] sm:$0x1]
            %v721 = vmul.f32 %v693, %v718
            %v722 = vsub.f32 %v720, %v721
            %723 = vst.msk [vmem:[#allocation5] sm:$0x1] %vm687, %v722
          $region120: #{backbone_forward.1} parent=111 // pred_fallthru
            _
        $region112: #{backbone_forward.1} parent=75 // pred_fallthru
          _
        %p724 = scmp.eq.s32.totalorder %s37, 1
        // Predicated region
        $region121: #{backbone_forward.1} parent=75 // pred_check
          %p725 = pneg %p724
        $region122: #{backbone_forward.1} parent=75 // pred_check_branch
          %727 = sbr.rel (%p725) target = $region124
        $region123: #{backbone_forward.1} parent=75 // pred_region
          %s728 = scalar_lea.vmem [#allocation2], %s603
          %v729 = vld [vmem:[%s728] sm:$0xff]
          %v730 = vld [vmem:[#allocation4] sm:$0x1]
          %v732 = vlaneseq
          %v733 = vshrl.u32 %v732, 7
          %v734 = vsub.s32 0, %v733
          %v735 = vrot.slane %v730, %v734
          %v737 = vmul.f32 %v729, %v735
          %v738 = vld [vmem:[#allocation5] sm:$0x1]
          %v740 = vlaneseq
          %v741 = vshrl.u32 %v740, 7
          %v742 = vsub.s32 0, %v741
          %v743 = vrot.slane %v738, %v742
          %v745 = vadd.f32 %v737, %v743
          %vm746 = vcmp.ge.f32.partialorder %v745, 0.0
          %v747 = vmul.f32 %v745, 0.01
          %v748 = vsel %vm746, %v745, %v747
          %v749 = vpack.c.bf16 %v748, %v748
          %v750 = vld [vmem:[%s4] sm:$0xf]
          %v751 = vld [vmem:[%s4 + $0x4] sm:$0xf]
          %v752 = vld [vmem:[%s4 + $0x8] sm:$0xf]
          %v753 = vld [vmem:[%s4 + $0xc] sm:$0xf]
          %v758 = vunpack.c.l.b16 %v750
          %v759 = vunpack.c.l.b16 %v751
          %v760 = vunpack.c.l.b16 %v752
          %v761 = vunpack.c.l.b16 %v753
          %v762 = vpack.c.b16 %v759, %v758
          %v763 = vpack.c.b16 %v761, %v760
          %vm766 = vcmask 261120
          %v768 = vsel %vm766, %v749, 0
          %770 = vmatprep.subr.bf16.mxu0 0
          %771 = vmatpush1.bf16.msra.mxu0 %v762
          %772 = vmatprep.subr.bf16.mxu0 0
          %773 = vmatpush1.bf16.msra.mxu0 %v763
          %774 = vmatprep.subr.bf16.mxu0 0
          %775 = vmatpush1.bf16.msra.mxu0 0
          %776 = vmatprep.subr.bf16.mxu0 0
          %777 = vmatpush1.bf16.msra.mxu0 0
          %778 = vmatprep.subr.bf16.mxu0 0
          %779 = vmatpush1.bf16.msra.mxu0 0
          %780 = vmatprep.subr.bf16.mxu0 0
          %781 = vmatpush1.bf16.msra.mxu0 0
          %782 = vmatprep.subr.bf16.mxu0 0
          %783 = vmatpush1.bf16.msra.mxu0 0
          %784 = vmatprep.subr.bf16.mxu0 0
          %785 = vmatpush1.bf16.msra.mxu0 0
          %786 = vmatprep.subr.bf16.mxu0 0
          %787 = vmatpush1.bf16.msra.mxu0 0
          %788 = vmatprep.subr.bf16.mxu0 0
          %789 = vmatpush1.bf16.msra.mxu0 0
          %790 = vmatprep.subr.bf16.mxu0 0
          %791 = vmatpush1.bf16.msra.mxu0 0
          %792 = vmatprep.subr.bf16.mxu0 0
          %793 = vmatpush1.bf16.msra.mxu0 0
          %794 = vmatprep.subr.bf16.mxu0 0
          %795 = vmatpush1.bf16.msra.mxu0 0
          %796 = vmatprep.subr.bf16.mxu0 0
          %797 = vmatpush1.bf16.msra.mxu0 0
          %798 = vmatprep.subr.bf16.mxu0 0
          %799 = vmatpush1.bf16.msra.mxu0 0
          %800 = vmatprep.subr.bf16.mxu0 0
          %801 = vmatpush1.bf16.msra.mxu0 0
          %802 = vmatprep.mubr.bf16.mxu0 0
          %803 = vmatmul.mubr.bf16.gmra.mrb[0].mxu0 %v768
          %v804 = vpop.f32.mrb[0].mxu0
          %v805 = vadd.f32 0.0, %v804
          %v806 = vpop.f32.mrb[0].mxu0
          %v807 = vpop.f32.mrb[0].mxu0
          %v808 = vpop.f32.mrb[0].mxu0
          %809 = vdwg.mxu0
          %810 = vst.msk [vmem:[%s728] sm:$0xff] %vm766, %v805
          %v811 = vlaneseq
          %v812 = vshrl.u32 %v811, 7
          %v813 = vstv %s603
          %v814 = vadd.s32 %v813, %v812
          %vm815 = vcmp.lt.s32.totalorder %v814, 8
          %v816 = vsel %vm815, 1, 0
          %vm817 = vcmp.eq.s32.totalorder %v816, 1
          %v818 = vsel %vm817, %v805, 0.0
          %p819 = scmp.eq.s32.totalorder %s38, 0
          // Predicated region
          $region125: #{backbone_forward.1} parent=123 // pred_check
            %p820 = pneg %p819
          $region126: #{backbone_forward.1} parent=123 // pred_check_branch
            %822 = sbr.rel (%p820) target = $region128
          $region127: #{backbone_forward.1} parent=123 // pred_region
            %vm823 = vcmask 253952
            %824 = vst.msk [vmem:[#allocation3] sm:$0x1] %vm823, 0.0
          $region128: #{backbone_forward.1} parent=123 // pred_fallthru
            _
          %v825 = vld [vmem:[#allocation3] sm:$0x1]
          %v826 = vsel %vm766, %v818, 0.0
          %v827 = vrot.slane %v826, 4
          %v828 = vadd.f32 %v826, %v827
          %v829 = vrot.slane %v828, 2
          %v830 = vadd.f32 %v828, %v829
          %v831 = vrot.slane %v830, 1
          %v832 = vadd.f32 %v830, %v831
          %v833 = vadd.f32 %v825, %v832
          %vm834 = vcmask 253952
          %835 = vst.msk [vmem:[#allocation3] sm:$0x1] %vm834, %v833
          // Predicated region
          $region129: #{backbone_forward.1} parent=123 // pred_check
            %p836 = pneg %p819
          $region130: #{backbone_forward.1} parent=123 // pred_check_branch
            %838 = sbr.rel (%p836) target = $region132
          $region131: #{backbone_forward.1} parent=123 // pred_region
            %v839 = vld [vmem:[#allocation3] sm:$0x1]
            %v840 = vmul.f32 %v839, 0.125
            %vm841 = vcmp.lt.s32.totalorder %v812, 8
            %v842 = vld [vmem:[#allocation2] sm:$0xff]
            %v844 = vlaneseq
            %v845 = vshrl.u32 %v844, 7
            %v846 = vsub.s32 0, %v845
            %v847 = vrot.slane %v840, %v846
            %v849 = vsub.f32 %v842, %v847
            %v850 = vsel %vm841, 1, 0
            %vm851 = vcmp.eq.s32.totalorder %v850, 1
            %v852 = vsel %vm851, %v849, 0.0
            %v853 = vmul.f32 %v852, %v852
            %v854 = vsel %vm766, %v853, 0.0
            %v855 = vrot.slane %v854, 4
            %v856 = vadd.f32 %v854, %v855
            %v857 = vrot.slane %v856, 2
            %v858 = vadd.f32 %v856, %v857
            %v859 = vrot.slane %v858, 1
            %v860 = vadd.f32 %v858, %v859
            %v861 = vmul.f32 %v860, 0.125
            %v862 = vld [vmem:[#allocation11] sm:$0x1]
            %v863 = vadd.f32 %v861, 1e-05
            %v864 = vrsqrt.pop %v863
            %v865 = vmul.f32 %v862, %v864
            %866 = vst.msk [vmem:[#allocation4] sm:$0x1] %vm834, %v865
            %v867 = vld [vmem:[#allocation12] sm:$0x1]
            %v868 = vmul.f32 %v840, %v865
            %v869 = vsub.f32 %v867, %v868
            %870 = vst.msk [vmem:[#allocation5] sm:$0x1] %vm834, %v869
          $region132: #{backbone_forward.1} parent=123 // pred_fallthru
            _
        $region124: #{backbone_forward.1} parent=75 // pred_fallthru
          _
        %p871 = scmp.eq.s32.totalorder %s37, 2
        // Predicated region
        $region133: #{backbone_forward.1} parent=75 // pred_check
          %p872 = pneg %p871
        $region134: #{backbone_forward.1} parent=75 // pred_check_branch
          %874 = sbr.rel (%p872) target = $region136
        $region135: #{backbone_forward.1} parent=75 // pred_region
          %s875 = scalar_lea.vmem [#allocation2], %s603
          %v876 = vld [vmem:[%s875] sm:$0xff]
          %v877 = vld [vmem:[#allocation4] sm:$0x1]
          %v879 = vlaneseq
          %v880 = vshrl.u32 %v879, 7
          %v881 = vsub.s32 0, %v880
          %v882 = vrot.slane %v877, %v881
          %v884 = vmul.f32 %v876, %v882
          %v885 = vld [vmem:[#allocation5] sm:$0x1]
          %v887 = vlaneseq
          %v888 = vshrl.u32 %v887, 7
          %v889 = vsub.s32 0, %v888
          %v890 = vrot.slane %v885, %v889
          %v892 = vadd.f32 %v884, %v890
          %vm893 = vcmp.ge.f32.partialorder %v892, 0.0
          %v894 = vmul.f32 %v892, 0.01
          %v895 = vsel %vm893, %v892, %v894
          %v896 = vpack.c.bf16 %v895, %v895
          %v897 = vld [vmem:[%s7] sm:$0xf]
          %v898 = vld [vmem:[%s7 + $0x4] sm:$0xf]
          %v899 = vld [vmem:[%s7 + $0x8] sm:$0xf]
          %v900 = vld [vmem:[%s7 + $0xc] sm:$0xf]
          %v905 = vunpack.c.l.b16 %v897
          %v906 = vunpack.c.l.b16 %v898
          %v907 = vunpack.c.l.b16 %v899
          %v908 = vunpack.c.l.b16 %v900
          %v909 = vpack.c.b16 %v906, %v905
          %v910 = vpack.c.b16 %v908, %v907
          %vm913 = vcmask 261120
          %v915 = vsel %vm913, %v896, 0
          %917 = vmatprep.subr.bf16.mxu0 0
          %918 = vmatpush1.bf16.msra.mxu0 %v909
          %919 = vmatprep.subr.bf16.mxu0 0
          %920 = vmatpush1.bf16.msra.mxu0 %v910
          %921 = vmatprep.subr.bf16.mxu0 0
          %922 = vmatpush1.bf16.msra.mxu0 0
          %923 = vmatprep.subr.bf16.mxu0 0
          %924 = vmatpush1.bf16.msra.mxu0 0
          %925 = vmatprep.subr.bf16.mxu0 0
          %926 = vmatpush1.bf16.msra.mxu0 0
          %927 = vmatprep.subr.bf16.mxu0 0
          %928 = vmatpush1.bf16.msra.mxu0 0
          %929 = vmatprep.subr.bf16.mxu0 0
          %930 = vmatpush1.bf16.msra.mxu0 0
          %931 = vmatprep.subr.bf16.mxu0 0
          %932 = vmatpush1.bf16.msra.mxu0 0
          %933 = vmatprep.subr.bf16.mxu0 0
          %934 = vmatpush1.bf16.msra.mxu0 0
          %935 = vmatprep.subr.bf16.mxu0 0
          %936 = vmatpush1.bf16.msra.mxu0 0
          %937 = vmatprep.subr.bf16.mxu0 0
          %938 = vmatpush1.bf16.msra.mxu0 0
          %939 = vmatprep.subr.bf16.mxu0 0
          %940 = vmatpush1.bf16.msra.mxu0 0
          %941 = vmatprep.subr.bf16.mxu0 0
          %942 = vmatpush1.bf16.msra.mxu0 0
          %943 = vmatprep.subr.bf16.mxu0 0
          %944 = vmatpush1.bf16.msra.mxu0 0
          %945 = vmatprep.subr.bf16.mxu0 0
          %946 = vmatpush1.bf16.msra.mxu0 0
          %947 = vmatprep.subr.bf16.mxu0 0
          %948 = vmatpush1.bf16.msra.mxu0 0
          %949 = vmatprep.mubr.bf16.mxu0 0
          %950 = vmatmul.mubr.bf16.gmra.mrb[0].mxu0 %v915
          %v951 = vpop.f32.mrb[0].mxu0
          %v952 = vadd.f32 0.0, %v951
          %v953 = vpop.f32.mrb[0].mxu0
          %v954 = vpop.f32.mrb[0].mxu0
          %v955 = vpop.f32.mrb[0].mxu0
          %956 = vdwg.mxu0
          %957 = vst.msk [vmem:[%s875] sm:$0xff] %vm913, %v952
          %v958 = vlaneseq
          %v959 = vshrl.u32 %v958, 7
          %v960 = vstv %s603
          %v961 = vadd.s32 %v960, %v959
          %vm962 = vcmp.lt.s32.totalorder %v961, 8
          %v963 = vsel %vm962, 1, 0
          %vm964 = vcmp.eq.s32.totalorder %v963, 1
          %v965 = vsel %vm964, %v952, 0.0
          %p966 = scmp.eq.s32.totalorder %s38, 0
          // Predicated region
          $region137: #{backbone_forward.1} parent=135 // pred_check
            %p967 = pneg %p966
          $region138: #{backbone_forward.1} parent=135 // pred_check_branch
            %969 = sbr.rel (%p967) target = $region140
          $region139: #{backbone_forward.1} parent=135 // pred_region
            %vm970 = vcmask 253952
            %971 = vst.msk [vmem:[#allocation3] sm:$0x1] %vm970, 0.0
          $region140: #{backbone_forward.1} parent=135 // pred_fallthru
            _
          %v972 = vld [vmem:[#allocation3] sm:$0x1]
          %v973 = vsel %vm913, %v965, 0.0
          %v974 = vrot.slane %v973, 4
          %v975 = vadd.f32 %v973, %v974
          %v976 = vrot.slane %v975, 2
          %v977 = vadd.f32 %v975, %v976
          %v978 = vrot.slane %v977, 1
          %v979 = vadd.f32 %v977, %v978
          %v980 = vadd.f32 %v972, %v979
          %vm981 = vcmask 253952
          %982 = vst.msk [vmem:[#allocation3] sm:$0x1] %vm981, %v980
          // Predicated region
          $region141: #{backbone_forward.1} parent=135 // pred_check
            %p983 = pneg %p966
          $region142: #{backbone_forward.1} parent=135 // pred_check_branch
            %985 = sbr.rel (%p983) target = $region144
          $region143: #{backbone_forward.1} parent=135 // pred_region
            %v986 = vld [vmem:[#allocation3] sm:$0x1]
            %v987 = vmul.f32 %v986, 0.125
            %vm988 = vcmp.lt.s32.totalorder %v959, 8
            %v989 = vld [vmem:[#allocation2] sm:$0xff]
            %v991 = vlaneseq
            %v992 = vshrl.u32 %v991, 7
            %v993 = vsub.s32 0, %v992
            %v994 = vrot.slane %v987, %v993
            %v996 = vsub.f32 %v989, %v994
            %v997 = vsel %vm988, 1, 0
            %vm998 = vcmp.eq.s32.totalorder %v997, 1
            %v999 = vsel %vm998, %v996, 0.0
            %v1000 = vmul.f32 %v999, %v999
            %v1001 = vsel %vm913, %v1000, 0.0
            %v1002 = vrot.slane %v1001, 4
            %v1003 = vadd.f32 %v1001, %v1002
            %v1004 = vrot.slane %v1003, 2
            %v1005 = vadd.f32 %v1003, %v1004
            %v1006 = vrot.slane %v1005, 1
            %v1007 = vadd.f32 %v1005, %v1006
            %v1008 = vmul.f32 %v1007, 0.125
            %v1009 = vld [vmem:[#allocation14] sm:$0x1]
            %v1010 = vadd.f32 %v1008, 1e-05
            %v1011 = vrsqrt.pop %v1010
            %v1012 = vmul.f32 %v1009, %v1011
            %1013 = vst.msk [vmem:[#allocation4] sm:$0x1] %vm981, %v1012
            %v1014 = vld [vmem:[#allocation15] sm:$0x1]
            %v1015 = vmul.f32 %v987, %v1012
            %v1016 = vsub.f32 %v1014, %v1015
            %1017 = vst.msk [vmem:[#allocation5] sm:$0x1] %vm981, %v1016
          $region144: #{backbone_forward.1} parent=135 // pred_fallthru
            _
        $region136: #{backbone_forward.1} parent=75 // pred_fallthru
          _
        %p1018 = scmp.eq.s32.totalorder %s37, 3
        // Predicated region
        $region145: #{backbone_forward.1} parent=75 // pred_check
          %p1019 = pneg %p1018
        $region146: #{backbone_forward.1} parent=75 // pred_check_branch
          %1021 = sbr.rel (%p1019) target = $region148
        $region147: #{backbone_forward.1} parent=75 // pred_region
          %s1022 = scalar_lea.vmem [#allocation2], %s603
          %v1023 = vld [vmem:[%s1022] sm:$0xff]
          %v1024 = vld [vmem:[#allocation4] sm:$0x1]
          %v1026 = vlaneseq
          %v1027 = vshrl.u32 %v1026, 7
          %v1028 = vsub.s32 0, %v1027
          %v1029 = vrot.slane %v1024, %v1028
          %v1031 = vmul.f32 %v1023, %v1029
          %v1032 = vld [vmem:[#allocation5] sm:$0x1]
          %v1034 = vlaneseq
          %v1035 = vshrl.u32 %v1034, 7
          %v1036 = vsub.s32 0, %v1035
          %v1037 = vrot.slane %v1032, %v1036
          %v1039 = vadd.f32 %v1031, %v1037
          %vm1040 = vcmp.ge.f32.partialorder %v1039, 0.0
          %v1041 = vmul.f32 %v1039, 0.01
          %v1042 = vsel %vm1040, %v1039, %v1041
          %v1043 = vpack.c.bf16 %v1042, %v1042
          %v1044 = vld [vmem:[#allocation17] sm:$0xff]
          %v1045 = vld [vmem:[#allocation17 + $0x8] sm:$0xff]
          %v1046 = vld [vmem:[#allocation17 + $0x10] sm:$0xff]
          %v1047 = vld [vmem:[#allocation17 + $0x18] sm:$0xff]
          %v1048 = vld [vmem:[#allocation17 + $0x20] sm:$0xff]
          %v1049 = vld [vmem:[#allocation17 + $0x28] sm:$0xff]
          %v1050 = vld [vmem:[#allocation17 + $0x30] sm:$0xff]
          %v1051 = vld [vmem:[#allocation17 + $0x38] sm:$0xff]
          %v1052 = vld [vmem:[#allocation17 + $0x40] sm:$0xff]
          %v1053 = vld [vmem:[#allocation17 + $0x48] sm:$0xff]
          %v1054 = vld [vmem:[#allocation17 + $0x50] sm:$0xff]
          %v1055 = vld [vmem:[#allocation17 + $0x58] sm:$0xff]
          %v1056 = vld [vmem:[#allocation17 + $0x60] sm:$0xff]
          %v1057 = vld [vmem:[#allocation17 + $0x68] sm:$0xff]
          %v1058 = vld [vmem:[#allocation17 + $0x70] sm:$0xff]
          %v1059 = vld [vmem:[#allocation17 + $0x78] sm:$0xff]
          %v1060 = vld [vmem:[%s11] sm:$0xff]
          %v1062 = vlaneseq
          %v1063 = vshrl.u32 %v1062, 7
          %v1064 = vsub.s32 0, %v1063
          %v1065 = vrot.slane %v1060, %v1064
          %v1066 = vlaneseq
          %v1067 = vshrl.u32 %v1066, 7
          %v1068 = vsub.s32 1, %v1067
          %v1069 = vrot.slane %v1060, %v1068
          %v1070 = vlaneseq
          %v1071 = vshrl.u32 %v1070, 7
          %v1072 = vsub.s32 2, %v1071
          %v1073 = vrot.slane %v1060, %v1072
          %v1074 = vlaneseq
          %v1075 = vshrl.u32 %v1074, 7
          %v1076 = vsub.s32 3, %v1075
          %v1077 = vrot.slane %v1060, %v1076
          %v1078 = vlaneseq
          %v1079 = vshrl.u32 %v1078, 7
          %v1080 = vsub.s32 4, %v1079
          %v1081 = vrot.slane %v1060, %v1080
          %v1082 = vlaneseq
          %v1083 = vshrl.u32 %v1082, 7
          %v1084 = vsub.s32 5, %v1083
          %v1085 = vrot.slane %v1060, %v1084
          %v1086 = vlaneseq
          %v1087 = vshrl.u32 %v1086, 7
          %v1088 = vsub.s32 6, %v1087
          %v1089 = vrot.slane %v1060, %v1088
          %v1090 = vlaneseq
          %v1091 = vshrl.u32 %v1090, 7
          %v1092 = vsub.s32 7, %v1091
          %v1093 = vrot.slane %v1060, %v1092
          %v1118 = vunpack.c.l.b16 %v1044
          %v1119 = vunpack.c.h.b16 %v1044
          %v1120 = vunpack.c.l.b16 %v1045
          %v1121 = vunpack.c.h.b16 %v1045
          %v1122 = vunpack.c.l.b16 %v1046
          %v1123 = vunpack.c.h.b16 %v1046
          %v1124 = vunpack.c.l.b16 %v1047
          %v1125 = vunpack.c.h.b16 %v1047
          %v1126 = vunpack.c.l.b16 %v1048
          %v1127 = vunpack.c.h.b16 %v1048
          %v1128 = vunpack.c.l.b16 %v1049
          %v1129 = vunpack.c.h.b16 %v1049
          %v1130 = vunpack.c.l.b16 %v1050
          %v1131 = vunpack.c.h.b16 %v1050
          %v1132 = vunpack.c.l.b16 %v1051
          %v1133 = vunpack.c.h.b16 %v1051
          %v1134 = vunpack.c.l.b16 %v1052
          %v1135 = vunpack.c.h.b16 %v1052
          %v1136 = vunpack.c.l.b16 %v1053
          %v1137 = vunpack.c.h.b16 %v1053
          %v1138 = vunpack.c.l.b16 %v1054
          %v1139 = vunpack.c.h.b16 %v1054
          %v1140 = vunpack.c.l.b16 %v1055
          %v1141 = vunpack.c.h.b16 %v1055
          %v1142 = vunpack.c.l.b16 %v1056
          %v1143 = vunpack.c.h.b16 %v1056
          %v1144 = vunpack.c.l.b16 %v1057
          %v1145 = vunpack.c.h.b16 %v1057
          %v1146 = vunpack.c.l.b16 %v1058
          %v1147 = vunpack.c.h.b16 %v1058
          %v1148 = vunpack.c.l.b16 %v1059
          %v1149 = vunpack.c.h.b16 %v1059
          %v1150 = vpack.c.b16 %v1126, %v1118
          %v1151 = vpack.c.b16 %v1127, %v1119
          %v1152 = vpack.c.b16 %v1128, %v1120
          %v1153 = vpack.c.b16 %v1129, %v1121
          %v1154 = vpack.c.b16 %v1130, %v1122
          %v1155 = vpack.c.b16 %v1131, %v1123
          %v1156 = vpack.c.b16 %v1132, %v1124
          %v1157 = vpack.c.b16 %v1133, %v1125
          %v1158 = vpack.c.b16 %v1142, %v1134
          %v1159 = vpack.c.b16 %v1143, %v1135
          %v1160 = vpack.c.b16 %v1144, %v1136
          %v1161 = vpack.c.b16 %v1145, %v1137
          %v1162 = vpack.c.b16 %v1146, %v1138
          %v1163 = vpack.c.b16 %v1147, %v1139
          %v1164 = vpack.c.b16 %v1148, %v1140
          %v1165 = vpack.c.b16 %v1149, %v1141
          %vm1182 = vcmask 261120
          %v1184 = vsel %vm1182, %v1043, 0
          %1186 = vmatprep.subr.bf16.mxu0 %v1151
          %1187 = vmatpush1.bf16.msra.mxu0 %v1150
          %1188 = vmatprep.subr.bf16.mxu0 %v1159
          %1189 = vmatpush1.bf16.msra.mxu0 %v1158
          %1190 = vmatprep.subr.bf16.mxu0 0
          %1191 = vmatpush1.bf16.msra.mxu0 0
          %1192 = vmatprep.subr.bf16.mxu0 0
          %1193 = vmatpush1.bf16.msra.mxu0 0
          %1194 = vmatprep.subr.bf16.mxu0 0
          %1195 = vmatpush1.bf16.msra.mxu0 0
          %1196 = vmatprep.subr.bf16.mxu0 0
          %1197 = vmatpush1.bf16.msra.mxu0 0
          %1198 = vmatprep.subr.bf16.mxu0 0
          %1199 = vmatpush1.bf16.msra.mxu0 0
          %1200 = vmatprep.subr.bf16.mxu0 0
          %1201 = vmatpush1.bf16.msra.mxu0 0
          %1202 = vmatprep.subr.bf16.mxu0 0
          %1203 = vmatpush1.bf16.msra.mxu0 0
          %1204 = vmatprep.subr.bf16.mxu0 0
          %1205 = vmatpush1.bf16.msra.mxu0 0
          %1206 = vmatprep.subr.bf16.mxu0 0
          %1207 = vmatpush1.bf16.msra.mxu0 0
          %1208 = vmatprep.subr.bf16.mxu0 0
          %1209 = vmatpush1.bf16.msra.mxu0 0
          %1210 = vmatprep.subr.bf16.mxu0 0
          %1211 = vmatpush1.bf16.msra.mxu0 0
          %1212 = vmatprep.subr.bf16.mxu0 0
          %1213 = vmatpush1.bf16.msra.mxu0 0
          %1214 = vmatprep.subr.bf16.mxu0 0
          %1215 = vmatpush1.bf16.msra.mxu0 0
          %1216 = vmatprep.subr.bf16.mxu0 0
          %1217 = vmatpush1.bf16.msra.mxu0 0
          %1218 = vmatprep.mubr.bf16.mxu0 0
          %1219 = vmatmul.mubr.bf16.gmra.mrb[0].mxu0 %v1184
          %v1220 = vpop.f32.mrb[0].mxu0
          %v1221 = vadd.f32 %v1065, %v1220
          %v1222 = vpop.f32.mrb[0].mxu0
          %v1223 = vadd.f32 %v1069, %v1222
          %v1224 = vpop.f32.mrb[0].mxu0
          %v1225 = vpop.f32.mrb[0].mxu0
          %1226 = vdwg.mxu0
          %1227 = vmatprep.subr.bf16.mxu0 %v1153
          %1228 = vmatpush1.bf16.msra.mxu0 %v1152
          %1229 = vmatprep.subr.bf16.mxu0 %v1161
          %1230 = vmatpush1.bf16.msra.mxu0 %v1160
          %1231 = vmatprep.subr.bf16.mxu0 0
          %1232 = vmatpush1.bf16.msra.mxu0 0
          %1233 = vmatprep.subr.bf16.mxu0 0
          %1234 = vmatpush1.bf16.msra.mxu0 0
          %1235 = vmatprep.subr.bf16.mxu0 0
          %1236 = vmatpush1.bf16.msra.mxu0 0
          %1237 = vmatprep.subr.bf16.mxu0 0
          %1238 = vmatpush1.bf16.msra.mxu0 0
          %1239 = vmatprep.subr.bf16.mxu0 0
          %1240 = vmatpush1.bf16.msra.mxu0 0
          %1241 = vmatprep.subr.bf16.mxu0 0
          %1242 = vmatpush1.bf16.msra.mxu0 0
          %1243 = vmatprep.subr.bf16.mxu0 0
          %1244 = vmatpush1.bf16.msra.mxu0 0
          %1245 = vmatprep.subr.bf16.mxu0 0
          %1246 = vmatpush1.bf16.msra.mxu0 0
          %1247 = vmatprep.subr.bf16.mxu0 0
          %1248 = vmatpush1.bf16.msra.mxu0 0
          %1249 = vmatprep.subr.bf16.mxu0 0
          %1250 = vmatpush1.bf16.msra.mxu0 0
          %1251 = vmatprep.subr.bf16.mxu0 0
          %1252 = vmatpush1.bf16.msra.mxu0 0
          %1253 = vmatprep.subr.bf16.mxu0 0
          %1254 = vmatpush1.bf16.msra.mxu0 0
          %1255 = vmatprep.subr.bf16.mxu0 0
          %1256 = vmatpush1.bf16.msra.mxu0 0
          %1257 = vmatprep.subr.bf16.mxu0 0
          %1258 = vmatpush1.bf16.msra.mxu0 0
          %1259 = vmatprep.mubr.bf16.mxu0 0
          %1260 = vmatmul.mubr.bf16.gmra.mrb[0].mxu0 %v1184
          %v1261 = vpop.f32.mrb[0].mxu0
          %v1262 = vadd.f32 %v1073, %v1261
          %v1263 = vpop.f32.mrb[0].mxu0
          %v1264 = vadd.f32 %v1077, %v1263
          %v1265 = vpop.f32.mrb[0].mxu0
          %v1266 = vpop.f32.mrb[0].mxu0
          %1267 = vdwg.mxu0
          %1268 = vmatprep.subr.bf16.mxu0 %v1155
          %1269 = vmatpush1.bf16.msra.mxu0 %v1154
          %1270 = vmatprep.subr.bf16.mxu0 %v1163
          %1271 = vmatpush1.bf16.msra.mxu0 %v1162
          %1272 = vmatprep.subr.bf16.mxu0 0
          %1273 = vmatpush1.bf16.msra.mxu0 0
          %1274 = vmatprep.subr.bf16.mxu0 0
          %1275 = vmatpush1.bf16.msra.mxu0 0
          %1276 = vmatprep.subr.bf16.mxu0 0
          %1277 = vmatpush1.bf16.msra.mxu0 0
          %1278 = vmatprep.subr.bf16.mxu0 0
          %1279 = vmatpush1.bf16.msra.mxu0 0
          %1280 = vmatprep.subr.bf16.mxu0 0
          %1281 = vmatpush1.bf16.msra.mxu0 0
          %1282 = vmatprep.subr.bf16.mxu0 0
          %1283 = vmatpush1.bf16.msra.mxu0 0
          %1284 = vmatprep.subr.bf16.mxu0 0
          %1285 = vmatpush1.bf16.msra.mxu0 0
          %1286 = vmatprep.subr.bf16.mxu0 0
          %1287 = vmatpush1.bf16.msra.mxu0 0
          %1288 = vmatprep.subr.bf16.mxu0 0
          %1289 = vmatpush1.bf16.msra.mxu0 0
          %1290 = vmatprep.subr.bf16.mxu0 0
          %1291 = vmatpush1.bf16.msra.mxu0 0
          %1292 = vmatprep.subr.bf16.mxu0 0
          %1293 = vmatpush1.bf16.msra.mxu0 0
          %1294 = vmatprep.subr.bf16.mxu0 0
          %1295 = vmatpush1.bf16.msra.mxu0 0
          %1296 = vmatprep.subr.bf16.mxu0 0
          %1297 = vmatpush1.bf16.msra.mxu0 0
          %1298 = vmatprep.subr.bf16.mxu0 0
          %1299 = vmatpush1.bf16.msra.mxu0 0
          %1300 = vmatprep.mubr.bf16.mxu0 0
          %1301 = vmatmul.mubr.bf16.gmra.mrb[0].mxu0 %v1184
          %v1302 = vpop.f32.mrb[0].mxu0
          %v1303 = vadd.f32 %v1081, %v1302
          %v1304 = vpop.f32.mrb[0].mxu0
          %v1305 = vadd.f32 %v1085, %v1304
          %v1306 = vpop.f32.mrb[0].mxu0
          %v1307 = vpop.f32.mrb[0].mxu0
          %1308 = vdwg.mxu0
          %1309 = vmatprep.subr.bf16.mxu0 %v1157
          %1310 = vmatpush1.bf16.msra.mxu0 %v1156
          %1311 = vmatprep.subr.bf16.mxu0 %v1165
          %1312 = vmatpush1.bf16.msra.mxu0 %v1164
          %1313 = vmatprep.subr.bf16.mxu0 0
          %1314 = vmatpush1.bf16.msra.mxu0 0
          %1315 = vmatprep.subr.bf16.mxu0 0
          %1316 = vmatpush1.bf16.msra.mxu0 0
          %1317 = vmatprep.subr.bf16.mxu0 0
          %1318 = vmatpush1.bf16.msra.mxu0 0
          %1319 = vmatprep.subr.bf16.mxu0 0
          %1320 = vmatpush1.bf16.msra.mxu0 0
          %1321 = vmatprep.subr.bf16.mxu0 0
          %1322 = vmatpush1.bf16.msra.mxu0 0
          %1323 = vmatprep.subr.bf16.mxu0 0
          %1324 = vmatpush1.bf16.msra.mxu0 0
          %1325 = vmatprep.subr.bf16.mxu0 0
          %1326 = vmatpush1.bf16.msra.mxu0 0
          %1327 = vmatprep.subr.bf16.mxu0 0
          %1328 = vmatpush1.bf16.msra.mxu0 0
          %1329 = vmatprep.subr.bf16.mxu0 0
          %1330 = vmatpush1.bf16.msra.mxu0 0
          %1331 = vmatprep.subr.bf16.mxu0 0
          %1332 = vmatpush1.bf16.msra.mxu0 0
          %1333 = vmatprep.subr.bf16.mxu0 0
          %1334 = vmatpush1.bf16.msra.mxu0 0
          %1335 = vmatprep.subr.bf16.mxu0 0
          %1336 = vmatpush1.bf16.msra.mxu0 0
          %1337 = vmatprep.subr.bf16.mxu0 0
          %1338 = vmatpush1.bf16.msra.mxu0 0
          %1339 = vmatprep.subr.bf16.mxu0 0
          %1340 = vmatpush1.bf16.msra.mxu0 0
          %1341 = vmatprep.mubr.bf16.mxu0 0
          %1342 = vmatmul.mubr.bf16.gmra.mrb[0].mxu0 %v1184
          %v1343 = vpop.f32.mrb[0].mxu0
          %v1344 = vadd.f32 %v1089, %v1343
          %v1345 = vpop.f32.mrb[0].mxu0
          %v1346 = vadd.f32 %v1093, %v1345
          %v1347 = vpop.f32.mrb[0].mxu0
          %v1348 = vpop.f32.mrb[0].mxu0
          %1349 = vdwg.mxu0
          %vm1350 = vcmp.ge.f32.partialorder %v1221, 0.0
          %vm1351 = vcmp.ge.f32.partialorder %v1223, 0.0
          %vm1352 = vcmp.ge.f32.partialorder %v1262, 0.0
          %vm1353 = vcmp.ge.f32.partialorder %v1264, 0.0
          %vm1354 = vcmp.ge.f32.partialorder %v1303, 0.0
          %vm1355 = vcmp.ge.f32.partialorder %v1305, 0.0
          %vm1356 = vcmp.ge.f32.partialorder %v1344, 0.0
          %vm1357 = vcmp.ge.f32.partialorder %v1346, 0.0
          %v1358 = vmul.f32 %v1221, 0.01
          %v1359 = vmul.f32 %v1223, 0.01
          %v1360 = vmul.f32 %v1262, 0.01
          %v1361 = vmul.f32 %v1264, 0.01
          %v1362 = vmul.f32 %v1303, 0.01
          %v1363 = vmul.f32 %v1305, 0.01
          %v1364 = vmul.f32 %v1344, 0.01
          %v1365 = vmul.f32 %v1346, 0.01
          %v1366 = vsel %vm1350, %v1221, %v1358
          %v1367 = vsel %vm1351, %v1223, %v1359
          %v1368 = vsel %vm1352, %v1262, %v1360
          %v1369 = vsel %vm1353, %v1264, %v1361
          %v1370 = vsel %vm1354, %v1303, %v1362
          %v1371 = vsel %vm1355, %v1305, %v1363
          %v1372 = vsel %vm1356, %v1344, %v1364
          %v1373 = vsel %vm1357, %v1346, %v1365
          %v1374 = vpack.c.bf16 %v1366, %v1366
          %v1375 = vpack.c.bf16 %v1367, %v1367
          %v1376 = vpack.c.bf16 %v1368, %v1368
          %v1377 = vpack.c.bf16 %v1369, %v1369
          %v1378 = vpack.c.bf16 %v1370, %v1370
          %v1379 = vpack.c.bf16 %v1371, %v1371
          %v1380 = vpack.c.bf16 %v1372, %v1372
          %v1381 = vpack.c.bf16 %v1373, %v1373
          %v1382 = vld [vmem:[#allocation18] sm:$0xf]
          %v1383 = vld [vmem:[#allocation18 + $0x4] sm:$0xf]
          %v1384 = vld [vmem:[#allocation18 + $0x8] sm:$0xf]
          %v1385 = vld [vmem:[#allocation18 + $0xc] sm:$0xf]
          %v1386 = vld [vmem:[#allocation18 + $0x10] sm:$0xf]
          %v1387 = vld [vmem:[#allocation18 + $0x14] sm:$0xf]
          %v1388 = vld [vmem:[#allocation18 + $0x18] sm:$0xf]
          %v1389 = vld [vmem:[#allocation18 + $0x1c] sm:$0xf]
          %v1390 = vld [vmem:[#allocation18 + $0x20] sm:$0xf]
          %v1391 = vld [vmem:[#allocation18 + $0x24] sm:$0xf]
          %v1392 = vld [vmem:[#allocation18 + $0x28] sm:$0xf]
          %v1393 = vld [vmem:[#allocation18 + $0x2c] sm:$0xf]
          %v1394 = vld [vmem:[#allocation18 + $0x30] sm:$0xf]
          %v1395 = vld [vmem:[#allocation18 + $0x34] sm:$0xf]
          %v1396 = vld [vmem:[#allocation18 + $0x38] sm:$0xf]
          %v1397 = vld [vmem:[#allocation18 + $0x3c] sm:$0xf]
          %v1398 = vld [vmem:[#allocation18 + $0x40] sm:$0xf]
          %v1399 = vld [vmem:[#allocation18 + $0x44] sm:$0xf]
          %v1400 = vld [vmem:[#allocation18 + $0x48] sm:$0xf]
          %v1401 = vld [vmem:[#allocation18 + $0x4c] sm:$0xf]
          %v1402 = vld [vmem:[#allocation18 + $0x50] sm:$0xf]
          %v1403 = vld [vmem:[#allocation18 + $0x54] sm:$0xf]
          %v1404 = vld [vmem:[#allocation18 + $0x58] sm:$0xf]
          %v1405 = vld [vmem:[#allocation18 + $0x5c] sm:$0xf]
          %v1406 = vld [vmem:[#allocation18 + $0x60] sm:$0xf]
          %v1407 = vld [vmem:[#allocation18 + $0x64] sm:$0xf]
          %v1408 = vld [vmem:[#allocation18 + $0x68] sm:$0xf]
          %v1409 = vld [vmem:[#allocation18 + $0x6c] sm:$0xf]
          %v1410 = vld [vmem:[#allocation18 + $0x70] sm:$0xf]
          %v1411 = vld [vmem:[#allocation18 + $0x74] sm:$0xf]
          %v1412 = vld [vmem:[#allocation18 + $0x78] sm:$0xf]
          %v1413 = vld [vmem:[#allocation18 + $0x7c] sm:$0xf]
          %v1414 = vld [vmem:[#allocation18 + $0x80] sm:$0xf]
          %v1415 = vld [vmem:[#allocation18 + $0x84] sm:$0xf]
          %v1416 = vld [vmem:[#allocation18 + $0x88] sm:$0xf]
          %v1417 = vld [vmem:[#allocation18 + $0x8c] sm:$0xf]
          %v1418 = vld [vmem:[#allocation18 + $0x90] sm:$0xf]
          %v1419 = vld [vmem:[#allocation18 + $0x94] sm:$0xf]
          %v1420 = vld [vmem:[#allocation18 + $0x98] sm:$0xf]
          %v1421 = vld [vmem:[#allocation18 + $0x9c] sm:$0xf]
          %v1422 = vld [vmem:[#allocation18 + $0xa0] sm:$0xf]
          %v1423 = vld [vmem:[#allocation18 + $0xa4] sm:$0xf]
          %v1424 = vld [vmem:[#allocation18 + $0xa8] sm:$0xf]
          %v1425 = vld [vmem:[#allocation18 + $0xac] sm:$0xf]
          %v1426 = vld [vmem:[#allocation18 + $0xb0] sm:$0xf]
          %v1427 = vld [vmem:[#allocation18 + $0xb4] sm:$0xf]
          %v1428 = vld [vmem:[#allocation18 + $0xb8] sm:$0xf]
          %v1429 = vld [vmem:[#allocation18 + $0xbc] sm:$0xf]
          %v1430 = vld [vmem:[#allocation18 + $0xc0] sm:$0xf]
          %v1431 = vld [vmem:[#allocation18 + $0xc4] sm:$0xf]
          %v1432 = vld [vmem:[#allocation18 + $0xc8] sm:$0xf]
          %v1433 = vld [vmem:[#allocation18 + $0xcc] sm:$0xf]
          %v1434 = vld [vmem:[#allocation18 + $0xd0] sm:$0xf]
          %v1435 = vld [vmem:[#allocation18 + $0xd4] sm:$0xf]
          %v1436 = vld [vmem:[#allocation18 + $0xd8] sm:$0xf]
          %v1437 = vld [vmem:[#allocation18 + $0xdc] sm:$0xf]
          %v1438 = vld [vmem:[#allocation18 + $0xe0] sm:$0xf]
          %v1439 = vld [vmem:[#allocation18 + $0xe4] sm:$0xf]
          %v1440 = vld [vmem:[#allocation18 + $0xe8] sm:$0xf]
          %v1441 = vld [vmem:[#allocation18 + $0xec] sm:$0xf]
          %v1442 = vld [vmem:[#allocation18 + $0xf0] sm:$0xf]
          %v1443 = vld [vmem:[#allocation18 + $0xf4] sm:$0xf]
          %v1444 = vld [vmem:[#allocation18 + $0xf8] sm:$0xf]
          %v1445 = vld [vmem:[#allocation18 + $0xfc] sm:$0xf]
          %v1446 = vld [vmem:[#allocation18 + $0x100] sm:$0xf]
          %v1447 = vld [vmem:[#allocation18 + $0x104] sm:$0xf]
          %v1448 = vld [vmem:[#allocation18 + $0x108] sm:$0xf]
          %v1449 = vld [vmem:[#allocation18 + $0x10c] sm:$0xf]
          %v1450 = vld [vmem:[#allocation18 + $0x110] sm:$0xf]
          %v1451 = vld [vmem:[#allocation18 + $0x114] sm:$0xf]
          %v1452 = vld [vmem:[#allocation18 + $0x118] sm:$0xf]
          %v1453 = vld [vmem:[#allocation18 + $0x11c] sm:$0xf]
          %v1454 = vld [vmem:[#allocation18 + $0x120] sm:$0xf]
          %v1455 = vld [vmem:[#allocation18 + $0x124] sm:$0xf]
          %v1456 = vld [vmem:[#allocation18 + $0x128] sm:$0xf]
          %v1457 = vld [vmem:[#allocation18 + $0x12c] sm:$0xf]
          %v1458 = vld [vmem:[#allocation18 + $0x130] sm:$0xf]
          %v1459 = vld [vmem:[#allocation18 + $0x134] sm:$0xf]
          %v1460 = vld [vmem:[#allocation18 + $0x138] sm:$0xf]
          %v1461 = vld [vmem:[#allocation18 + $0x13c] sm:$0xf]
          %v1462 = vld [vmem:[#allocation18 + $0x140] sm:$0xf]
          %v1463 = vld [vmem:[#allocation18 + $0x144] sm:$0xf]
          %v1464 = vld [vmem:[#allocation18 + $0x148] sm:$0xf]
          %v1465 = vld [vmem:[#allocation18 + $0x14c] sm:$0xf]
          %v1466 = vld [vmem:[#allocation18 + $0x150] sm:$0xf]
          %v1467 = vld [vmem:[#allocation18 + $0x154] sm:$0xf]
          %v1468 = vld [vmem:[#allocation18 + $0x158] sm:$0xf]
          %v1469 = vld [vmem:[#allocation18 + $0x15c] sm:$0xf]
          %v1470 = vld [vmem:[#allocation18 + $0x160] sm:$0xf]
          %v1471 = vld [vmem:[#allocation18 + $0x164] sm:$0xf]
          %v1472 = vld [vmem:[#allocation18 + $0x168] sm:$0xf]
          %v1473 = vld [vmem:[#allocation18 + $0x16c] sm:$0xf]
          %v1474 = vld [vmem:[#allocation18 + $0x170] sm:$0xf]
          %v1475 = vld [vmem:[#allocation18 + $0x174] sm:$0xf]
          %v1476 = vld [vmem:[#allocation18 + $0x178] sm:$0xf]
          %v1477 = vld [vmem:[#allocation18 + $0x17c] sm:$0xf]
          %v1478 = vld [vmem:[#allocation18 + $0x180] sm:$0xf]
          %v1479 = vld [vmem:[#allocation18 + $0x184] sm:$0xf]
          %v1480 = vld [vmem:[#allocation18 + $0x188] sm:$0xf]
          %v1481 = vld [vmem:[#allocation18 + $0x18c] sm:$0xf]
          %v1482 = vld [vmem:[#allocation18 + $0x190] sm:$0xf]
          %v1483 = vld [vmem:[#allocation18 + $0x194] sm:$0xf]
          %v1484 = vld [vmem:[#allocation18 + $0x198] sm:$0xf]
          %v1485 = vld [vmem:[#allocation18 + $0x19c] sm:$0xf]
          %v1486 = vld [vmem:[#allocation18 + $0x1a0] sm:$0xf]
          %v1487 = vld [vmem:[#allocation18 + $0x1a4] sm:$0xf]
          %v1488 = vld [vmem:[#allocation18 + $0x1a8] sm:$0xf]
          %v1489 = vld [vmem:[#allocation18 + $0x1ac] sm:$0xf]
          %v1490 = vld [vmem:[#allocation18 + $0x1b0] sm:$0xf]
          %v1491 = vld [vmem:[#allocation18 + $0x1b4] sm:$0xf]
          %v1492 = vld [vmem:[#allocation18 + $0x1b8] sm:$0xf]
          %v1493 = vld [vmem:[#allocation18 + $0x1bc] sm:$0xf]
          %v1494 = vld [vmem:[#allocation18 + $0x1c0] sm:$0xf]
          %v1495 = vld [vmem:[#allocation18 + $0x1c4] sm:$0xf]
          %v1496 = vld [vmem:[#allocation18 + $0x1c8] sm:$0xf]
          %v1497 = vld [vmem:[#allocation18 + $0x1cc] sm:$0xf]
          %v1498 = vld [vmem:[#allocation18 + $0x1d0] sm:$0xf]
          %v1499 = vld [vmem:[#allocation18 + $0x1d4] sm:$0xf]
          %v1500 = vld [vmem:[#allocation18 + $0x1d8] sm:$0xf]
          %v1501 = vld [vmem:[#allocation18 + $0x1dc] sm:$0xf]
          %v1502 = vld [vmem:[#allocation18 + $0x1e0] sm:$0xf]
          %v1503 = vld [vmem:[#allocation18 + $0x1e4] sm:$0xf]
          %v1504 = vld [vmem:[#allocation18 + $0x1e8] sm:$0xf]
          %v1505 = vld [vmem:[#allocation18 + $0x1ec] sm:$0xf]
          %v1506 = vld [vmem:[#allocation18 + $0x1f0] sm:$0xf]
          %v1507 = vld [vmem:[#allocation18 + $0x1f4] sm:$0xf]
          %v1508 = vld [vmem:[#allocation18 + $0x1f8] sm:$0xf]
          %v1509 = vld [vmem:[#allocation18 + $0x1fc] sm:$0xf]
          %v1510 = vld [vmem:[%s13] sm:$0x1]
          %v1512 = vlaneseq
          %v1513 = vshrl.u32 %v1512, 7
          %v1514 = vsub.s32 0, %v1513
          %v1515 = vrot.slane %v1510, %v1514
          %v1645 = vunpack.c.l.b16 %v1382
          %v1646 = vunpack.c.l.b16 %v1383
          %v1647 = vunpack.c.l.b16 %v1384
          %v1648 = vunpack.c.l.b16 %v1385
          %v1649 = vunpack.c.l.b16 %v1386
          %v1650 = vunpack.c.l.b16 %v1387
          %v1651 = vunpack.c.l.b16 %v1388
          %v1652 = vunpack.c.l.b16 %v1389
          %v1653 = vunpack.c.l.b16 %v1390
          %v1654 = vunpack.c.l.b16 %v1391
          %v1655 = vunpack.c.l.b16 %v1392
          %v1656 = vunpack.c.l.b16 %v1393
          %v1657 = vunpack.c.l.b16 %v1394
          %v1658 = vunpack.c.l.b16 %v1395
          %v1659 = vunpack.c.l.b16 %v1396
          %v1660 = vunpack.c.l.b16 %v1397
          %v1661 = vunpack.c.l.b16 %v1398
          %v1662 = vunpack.c.l.b16 %v1399
          %v1663 = vunpack.c.l.b16 %v1400
          %v1664 = vunpack.c.l.b16 %v1401
          %v1665 = vunpack.c.l.b16 %v1402
          %v1666 = vunpack.c.l.b16 %v1403
          %v1667 = vunpack.c.l.b16 %v1404
          %v1668 = vunpack.c.l.b16 %v1405
          %v1669 = vunpack.c.l.b16 %v1406
          %v1670 = vunpack.c.l.b16 %v1407
          %v1671 = vunpack.c.l.b16 %v1408
          %v1672 = vunpack.c.l.b16 %v1409
          %v1673 = vunpack.c.l.b16 %v1410
          %v1674 = vunpack.c.l.b16 %v1411
          %v1675 = vunpack.c.l.b16 %v1412
          %v1676 = vunpack.c.l.b16 %v1413
          %v1677 = vunpack.c.l.b16 %v1414
          %v1678 = vunpack.c.l.b16 %v1415
          %v1679 = vunpack.c.l.b16 %v1416
          %v1680 = vunpack.c.l.b16 %v1417
          %v1681 = vunpack.c.l.b16 %v1418
          %v1682 = vunpack.c.l.b16 %v1419
          %v1683 = vunpack.c.l.b16 %v1420
          %v1684 = vunpack.c.l.b16 %v1421
          %v1685 = vunpack.c.l.b16 %v1422
          %v1686 = vunpack.c.l.b16 %v1423
          %v1687 = vunpack.c.l.b16 %v1424
          %v1688 = vunpack.c.l.b16 %v1425
          %v1689 = vunpack.c.l.b16 %v1426
          %v1690 = vunpack.c.l.b16 %v1427
          %v1691 = vunpack.c.l.b16 %v1428
          %v1692 = vunpack.c.l.b16 %v1429
          %v1693 = vunpack.c.l.b16 %v1430
          %v1694 = vunpack.c.l.b16 %v1431
          %v1695 = vunpack.c.l.b16 %v1432
          %v1696 = vunpack.c.l.b16 %v1433
          %v1697 = vunpack.c.l.b16 %v1434
          %v1698 = vunpack.c.l.b16 %v1435
          %v1699 = vunpack.c.l.b16 %v1436
          %v1700 = vunpack.c.l.b16 %v1437
          %v1701 = vunpack.c.l.b16 %v1438
          %v1702 = vunpack.c.l.b16 %v1439
          %v1703 = vunpack.c.l.b16 %v1440
          %v1704 = vunpack.c.l.b16 %v1441
          %v1705 = vunpack.c.l.b16 %v1442
          %v1706 = vunpack.c.l.b16 %v1443
          %v1707 = vunpack.c.l.b16 %v1444
          %v1708 = vunpack.c.l.b16 %v1445
          %v1709 = vunpack.c.l.b16 %v1446
          %v1710 = vunpack.c.l.b16 %v1447
          %v1711 = vunpack.c.l.b16 %v1448
          %v1712 = vunpack.c.l.b16 %v1449
          %v1713 = vunpack.c.l.b16 %v1450
          %v1714 = vunpack.c.l.b16 %v1451
          %v1715 = vunpack.c.l.b16 %v1452
          %v1716 = vunpack.c.l.b16 %v1453
          %v1717 = vunpack.c.l.b16 %v1454
          %v1718 = vunpack.c.l.b16 %v1455
          %v1719 = vunpack.c.l.b16 %v1456
          %v1720 = vunpack.c.l.b16 %v1457
          %v1721 = vunpack.c.l.b16 %v1458
          %v1722 = vunpack.c.l.b16 %v1459
          %v1723 = vunpack.c.l.b16 %v1460
          %v1724 = vunpack.c.l.b16 %v1461
          %v1725 = vunpack.c.l.b16 %v1462
          %v1726 = vunpack.c.l.b16 %v1463
          %v1727 = vunpack.c.l.b16 %v1464
          %v1728 = vunpack.c.l.b16 %v1465
          %v1729 = vunpack.c.l.b16 %v1466
          %v1730 = vunpack.c.l.b16 %v1467
          %v1731 = vunpack.c.l.b16 %v1468
          %v1732 = vunpack.c.l.b16 %v1469
          %v1733 = vunpack.c.l.b16 %v1470
          %v1734 = vunpack.c.l.b16 %v1471
          %v1735 = vunpack.c.l.b16 %v1472
          %v1736 = vunpack.c.l.b16 %v1473
          %v1737 = vunpack.c.l.b16 %v1474
          %v1738 = vunpack.c.l.b16 %v1475
          %v1739 = vunpack.c.l.b16 %v1476
          %v1740 = vunpack.c.l.b16 %v1477
          %v1741 = vunpack.c.l.b16 %v1478
          %v1742 = vunpack.c.l.b16 %v1479
          %v1743 = vunpack.c.l.b16 %v1480
          %v1744 = vunpack.c.l.b16 %v1481
          %v1745 = vunpack.c.l.b16 %v1482
          %v1746 = vunpack.c.l.b16 %v1483
          %v1747 = vunpack.c.l.b16 %v1484
          %v1748 = vunpack.c.l.b16 %v1485
          %v1749 = vunpack.c.l.b16 %v1486
          %v1750 = vunpack.c.l.b16 %v1487
          %v1751 = vunpack.c.l.b16 %v1488
          %v1752 = vunpack.c.l.b16 %v1489
          %v1753 = vunpack.c.l.b16 %v1490
          %v1754 = vunpack.c.l.b16 %v1491
          %v1755 = vunpack.c.l.b16 %v1492
          %v1756 = vunpack.c.l.b16 %v1493
          %v1757 = vunpack.c.l.b16 %v1494
          %v1758 = vunpack.c.l.b16 %v1495
          %v1759 = vunpack.c.l.b16 %v1496
          %v1760 = vunpack.c.l.b16 %v1497
          %v1761 = vunpack.c.l.b16 %v1498
          %v1762 = vunpack.c.l.b16 %v1499
          %v1763 = vunpack.c.l.b16 %v1500
          %v1764 = vunpack.c.l.b16 %v1501
          %v1765 = vunpack.c.l.b16 %v1502
          %v1766 = vunpack.c.l.b16 %v1503
          %v1767 = vunpack.c.l.b16 %v1504
          %v1768 = vunpack.c.l.b16 %v1505
          %v1769 = vunpack.c.l.b16 %v1506
          %v1770 = vunpack.c.l.b16 %v1507
          %v1771 = vunpack.c.l.b16 %v1508
          %v1772 = vunpack.c.l.b16 %v1509
          %v1773 = vpack.c.b16 %v1646, %v1645
          %v1774 = vpack.c.b16 %v1648, %v1647
          %v1775 = vpack.c.b16 %v1650, %v1649
          %v1776 = vpack.c.b16 %v1652, %v1651
          %v1777 = vpack.c.b16 %v1654, %v1653
          %v1778 = vpack.c.b16 %v1656, %v1655
          %v1779 = vpack.c.b16 %v1658, %v1657
          %v1780 = vpack.c.b16 %v1660, %v1659
          %v1781 = vpack.c.b16 %v1662, %v1661
          %v1782 = vpack.c.b16 %v1664, %v1663
          %v1783 = vpack.c.b16 %v1666, %v1665
          %v1784 = vpack.c.b16 %v1668, %v1667
          %v1785 = vpack.c.b16 %v1670, %v1669
          %v1786 = vpack.c.b16 %v1672, %v1671
          %v1787 = vpack.c.b16 %v1674, %v1673
          %v1788 = vpack.c.b16 %v1676, %v1675
          %v1789 = vpack.c.b16 %v1678, %v1677
          %v1790 = vpack.c.b16 %v1680, %v1679
          %v1791 = vpack.c.b16 %v1682, %v1681
          %v1792 = vpack.c.b16 %v1684, %v1683
          %v1793 = vpack.c.b16 %v1686, %v1685
          %v1794 = vpack.c.b16 %v1688, %v1687
          %v1795 = vpack.c.b16 %v1690, %v1689
          %v1796 = vpack.c.b16 %v1692, %v1691
          %v1797 = vpack.c.b16 %v1694, %v1693
          %v1798 = vpack.c.b16 %v1696, %v1695
          %v1799 = vpack.c.b16 %v1698, %v1697
          %v1800 = vpack.c.b16 %v1700, %v1699
          %v1801 = vpack.c.b16 %v1702, %v1701
          %v1802 = vpack.c.b16 %v1704, %v1703
          %v1803 = vpack.c.b16 %v1706, %v1705
          %v1804 = vpack.c.b16 %v1708, %v1707
          %v1805 = vpack.c.b16 %v1710, %v1709
          %v1806 = vpack.c.b16 %v1712, %v1711
          %v1807 = vpack.c.b16 %v1714, %v1713
          %v1808 = vpack.c.b16 %v1716, %v1715
          %v1809 = vpack.c.b16 %v1718, %v1717
          %v1810 = vpack.c.b16 %v1720, %v1719
          %v1811 = vpack.c.b16 %v1722, %v1721
          %v1812 = vpack.c.b16 %v1724, %v1723
          %v1813 = vpack.c.b16 %v1726, %v1725
          %v1814 = vpack.c.b16 %v1728, %v1727
          %v1815 = vpack.c.b16 %v1730, %v1729
          %v1816 = vpack.c.b16 %v1732, %v1731
          %v1817 = vpack.c.b16 %v1734, %v1733
          %v1818 = vpack.c.b16 %v1736, %v1735
          %v1819 = vpack.c.b16 %v1738, %v1737
          %v1820 = vpack.c.b16 %v1740, %v1739
          %v1821 = vpack.c.b16 %v1742, %v1741
          %v1822 = vpack.c.b16 %v1744, %v1743
          %v1823 = vpack.c.b16 %v1746, %v1745
          %v1824 = vpack.c.b16 %v1748, %v1747
          %v1825 = vpack.c.b16 %v1750, %v1749
          %v1826 = vpack.c.b16 %v1752, %v1751
          %v1827 = vpack.c.b16 %v1754, %v1753
          %v1828 = vpack.c.b16 %v1756, %v1755
          %v1829 = vpack.c.b16 %v1758, %v1757
          %v1830 = vpack.c.b16 %v1760, %v1759
          %v1831 = vpack.c.b16 %v1762, %v1761
          %v1832 = vpack.c.b16 %v1764, %v1763
          %v1833 = vpack.c.b16 %v1766, %v1765
          %v1834 = vpack.c.b16 %v1768, %v1767
          %v1835 = vpack.c.b16 %v1770, %v1769
          %v1836 = vpack.c.b16 %v1772, %v1771
          %1901 = vmatprep.subr.bf16.mxu0 0
          %1902 = vmatpush1.bf16.msra.mxu0 %v1773
          %1903 = vmatprep.subr.bf16.mxu0 0
          %1904 = vmatpush1.bf16.msra.mxu0 %v1774
          %1905 = vmatprep.subr.bf16.mxu0 0
          %1906 = vmatpush1.bf16.msra.mxu0 %v1775
          %1907 = vmatprep.subr.bf16.mxu0 0
          %1908 = vmatpush1.bf16.msra.mxu0 %v1776
          %1909 = vmatprep.subr.bf16.mxu0 0
          %1910 = vmatpush1.bf16.msra.mxu0 %v1777
          %1911 = vmatprep.subr.bf16.mxu0 0
          %1912 = vmatpush1.bf16.msra.mxu0 %v1778
          %1913 = vmatprep.subr.bf16.mxu0 0
          %1914 = vmatpush1.bf16.msra.mxu0 %v1779
          %1915 = vmatprep.subr.bf16.mxu0 0
          %1916 = vmatpush1.bf16.msra.mxu0 %v1780
          %1917 = vmatprep.subr.bf16.mxu0 0
          %1918 = vmatpush1.bf16.msra.mxu0 %v1781
          %1919 = vmatprep.subr.bf16.mxu0 0
          %1920 = vmatpush1.bf16.msra.mxu0 %v1782
          %1921 = vmatprep.subr.bf16.mxu0 0
          %1922 = vmatpush1.bf16.msra.mxu0 %v1783
          %1923 = vmatprep.subr.bf16.mxu0 0
          %1924 = vmatpush1.bf16.msra.mxu0 %v1784
          %1925 = vmatprep.subr.bf16.mxu0 0
          %1926 = vmatpush1.bf16.msra.mxu0 %v1785
          %1927 = vmatprep.subr.bf16.mxu0 0
          %1928 = vmatpush1.bf16.msra.mxu0 %v1786
          %1929 = vmatprep.subr.bf16.mxu0 0
          %1930 = vmatpush1.bf16.msra.mxu0 %v1787
          %1931 = vmatprep.subr.bf16.mxu0 0
          %1932 = vmatpush1.bf16.msra.mxu0 %v1788
          %1933 = vmatprep.mubr.bf16.mxu0 %v1375
          %1934 = vmatmul.mubr.bf16.gmra.mrb[0].mxu0 %v1374
          %v1935 = vpop.f32.mrb[0].mxu0
          %v1936 = vadd.f32 %v1515, %v1935
          %v1937 = vpop.f32.mrb[0].mxu0
          %v1938 = vpop.f32.mrb[0].mxu0
          %v1939 = vpop.f32.mrb[0].mxu0
          %1940 = vdwg.mxu0
          %1941 = vmatprep.subr.bf16.mxu0 0
          %1942 = vmatpush1.bf16.msra.mxu0 %v1789
          %1943 = vmatprep.subr.bf16.mxu0 0
          %1944 = vmatpush1.bf16.msra.mxu0 %v1790
          %1945 = vmatprep.subr.bf16.mxu0 0
          %1946 = vmatpush1.bf16.msra.mxu0 %v1791
          %1947 = vmatprep.subr.bf16.mxu0 0
          %1948 = vmatpush1.bf16.msra.mxu0 %v1792
          %1949 = vmatprep.subr.bf16.mxu0 0
          %1950 = vmatpush1.bf16.msra.mxu0 %v1793
          %1951 = vmatprep.subr.bf16.mxu0 0
          %1952 = vmatpush1.bf16.msra.mxu0 %v1794
          %1953 = vmatprep.subr.bf16.mxu0 0
          %1954 = vmatpush1.bf16.msra.mxu0 %v1795
          %1955 = vmatprep.subr.bf16.mxu0 0
          %1956 = vmatpush1.bf16.msra.mxu0 %v1796
          %1957 = vmatprep.subr.bf16.mxu0 0
          %1958 = vmatpush1.bf16.msra.mxu0 %v1797
          %1959 = vmatprep.subr.bf16.mxu0 0
          %1960 = vmatpush1.bf16.msra.mxu0 %v1798
          %1961 = vmatprep.subr.bf16.mxu0 0
          %1962 = vmatpush1.bf16.msra.mxu0 %v1799
          %1963 = vmatprep.subr.bf16.mxu0 0
          %1964 = vmatpush1.bf16.msra.mxu0 %v1800
          %1965 = vmatprep.subr.bf16.mxu0 0
          %1966 = vmatpush1.bf16.msra.mxu0 %v1801
          %1967 = vmatprep.subr.bf16.mxu0 0
          %1968 = vmatpush1.bf16.msra.mxu0 %v1802
          %1969 = vmatprep.subr.bf16.mxu0 0
          %1970 = vmatpush1.bf16.msra.mxu0 %v1803
          %1971 = vmatprep.subr.bf16.mxu0 0
          %1972 = vmatpush1.bf16.msra.mxu0 %v1804
          %1973 = vmatprep.mubr.bf16.mxu0 %v1377
          %1974 = vmatmul.mubr.bf16.gmra.mrb[0].mxu0 %v1376
          %v1975 = vpop.f32.mrb[0].mxu0
          %v1976 = vadd.f32 %v1936, %v1975
          %v1977 = vpop.f32.mrb[0].mxu0
          %v1978 = vpop.f32.mrb[0].mxu0
          %v1979 = vpop.f32.mrb[0].mxu0
          %1980 = vdwg.mxu0
          %1981 = vmatprep.subr.bf16.mxu0 0
          %1982 = vmatpush1.bf16.msra.mxu0 %v1805
          %1983 = vmatprep.subr.bf16.mxu0 0
          %1984 = vmatpush1.bf16.msra.mxu0 %v1806
          %1985 = vmatprep.subr.bf16.mxu0 0
          %1986 = vmatpush1.bf16.msra.mxu0 %v1807
          %1987 = vmatprep.subr.bf16.mxu0 0
          %1988 = vmatpush1.bf16.msra.mxu0 %v1808
          %1989 = vmatprep.subr.bf16.mxu0 0
          %1990 = vmatpush1.bf16.msra.mxu0 %v1809
          %1991 = vmatprep.subr.bf16.mxu0 0
          %1992 = vmatpush1.bf16.msra.mxu0 %v1810
          %1993 = vmatprep.subr.bf16.mxu0 0
          %1994 = vmatpush1.bf16.msra.mxu0 %v1811
          %1995 = vmatprep.subr.bf16.mxu0 0
          %1996 = vmatpush1.bf16.msra.mxu0 %v1812
          %1997 = vmatprep.subr.bf16.mxu0 0
          %1998 = vmatpush1.bf16.msra.mxu0 %v1813
          %1999 = vmatprep.subr.bf16.mxu0 0
          %2000 = vmatpush1.bf16.msra.mxu0 %v1814
          %2001 = vmatprep.subr.bf16.mxu0 0
          %2002 = vmatpush1.bf16.msra.mxu0 %v1815
          %2003 = vmatprep.subr.bf16.mxu0 0
          %2004 = vmatpush1.bf16.msra.mxu0 %v1816
          %2005 = vmatprep.subr.bf16.mxu0 0
          %2006 = vmatpush1.bf16.msra.mxu0 %v1817
          %2007 = vmatprep.subr.bf16.mxu0 0
          %2008 = vmatpush1.bf16.msra.mxu0 %v1818
          %2009 = vmatprep.subr.bf16.mxu0 0
          %2010 = vmatpush1.bf16.msra.mxu0 %v1819
          %2011 = vmatprep.subr.bf16.mxu0 0
          %2012 = vmatpush1.bf16.msra.mxu0 %v1820
          %2013 = vmatprep.mubr.bf16.mxu0 %v1379
          %2014 = vmatmul.mubr.bf16.gmra.mrb[0].mxu0 %v1378
          %v2015 = vpop.f32.mrb[0].mxu0
          %v2016 = vadd.f32 %v1976, %v2015
          %v2017 = vpop.f32.mrb[0].mxu0
          %v2018 = vpop.f32.mrb[0].mxu0
          %v2019 = vpop.f32.mrb[0].mxu0
          %2020 = vdwg.mxu0
          %2021 = vmatprep.subr.bf16.mxu0 0
          %2022 = vmatpush1.bf16.msra.mxu0 %v1821
          %2023 = vmatprep.subr.bf16.mxu0 0
          %2024 = vmatpush1.bf16.msra.mxu0 %v1822
          %2025 = vmatprep.subr.bf16.mxu0 0
          %2026 = vmatpush1.bf16.msra.mxu0 %v1823
          %2027 = vmatprep.subr.bf16.mxu0 0
          %2028 = vmatpush1.bf16.msra.mxu0 %v1824
          %2029 = vmatprep.subr.bf16.mxu0 0
          %2030 = vmatpush1.bf16.msra.mxu0 %v1825
          %2031 = vmatprep.subr.bf16.mxu0 0
          %2032 = vmatpush1.bf16.msra.mxu0 %v1826
          %2033 = vmatprep.subr.bf16.mxu0 0
          %2034 = vmatpush1.bf16.msra.mxu0 %v1827
          %2035 = vmatprep.subr.bf16.mxu0 0
          %2036 = vmatpush1.bf16.msra.mxu0 %v1828
          %2037 = vmatprep.subr.bf16.mxu0 0
          %2038 = vmatpush1.bf16.msra.mxu0 %v1829
          %2039 = vmatprep.subr.bf16.mxu0 0
          %2040 = vmatpush1.bf16.msra.mxu0 %v1830
          %2041 = vmatprep.subr.bf16.mxu0 0
          %2042 = vmatpush1.bf16.msra.mxu0 %v1831
          %2043 = vmatprep.subr.bf16.mxu0 0
          %2044 = vmatpush1.bf16.msra.mxu0 %v1832
          %2045 = vmatprep.subr.bf16.mxu0 0
          %2046 = vmatpush1.bf16.msra.mxu0 %v1833
          %2047 = vmatprep.subr.bf16.mxu0 0
          %2048 = vmatpush1.bf16.msra.mxu0 %v1834
          %2049 = vmatprep.subr.bf16.mxu0 0
          %2050 = vmatpush1.bf16.msra.mxu0 %v1835
          %2051 = vmatprep.subr.bf16.mxu0 0
          %2052 = vmatpush1.bf16.msra.mxu0 %v1836
          %2053 = vmatprep.mubr.bf16.mxu0 %v1381
          %2054 = vmatmul.mubr.bf16.gmra.mrb[0].mxu0 %v1380
          %v2055 = vpop.f32.mrb[0].mxu0
          %v2056 = vadd.f32 %v2016, %v2055
          %v2057 = vpop.f32.mrb[0].mxu0
          %v2058 = vpop.f32.mrb[0].mxu0
          %v2059 = vpop.f32.mrb[0].mxu0
          %2060 = vdwg.mxu0
          %2061 = vst [vmem:[%s591] sm:$0xff] %v2056
        $region148: #{backbone_forward.1} parent=75 // pred_fallthru
          _
        %s2062 = sand.u32 %s360, 1
        %s2063 = scalar_lea.sflag [#allocation8], %s2062
        %s2064 = sand.u32 %s360, 1
        %s2065 = smul.addr %s2064, 8
        %s2066 = scalar_lea.vmem [#allocation20], %s2065
        // Predicated region
        $region149: #{backbone_forward.1} parent=75 // pred_check
          %p2067 = pneg %p370
        $region150: #{backbone_forward.1} parent=75 // pred_check_branch
          %2069 = sbr.rel (%p2067) target = $region152
        $region151: #{backbone_forward.1} parent=75 // pred_region
          %p2070 = scmp.eq.s32.totalorder %s37, 3
          %s2071 = scalar_select %p2070, %s38, 0
          %s2073 = ssub.s32 128, 128
          %2074 = vsyncadd %s2063, %s2073
          %s2075 = smul.addr %s2071, 128
          %s2076 = scalar_lea.hbm %s14, %s2075
          %s2078 = sshll.u32 %s2066, 4
          %s2079 = int_to_ptr.vmem [resolvable:$true] %s2078
          %2081 = dma.vmem_to_hbm [thread:$0]  %s2079, 128, %s2076, %s2063
        $region152: #{backbone_forward.1} parent=75 // pred_fallthru
          _
      $region76: #{backbone_forward.1} parent=5 // pred_fallthru
        _
      %p2082 = scmp.le.s32.totalorder 2, %s28
      // Predicated region
      $region153: #{backbone_forward.1} parent=5 // pred_check
        %p2083 = pneg %p2082
      $region154: #{backbone_forward.1} parent=5 // pred_check_branch
        %2085 = sbr.rel (%p2083) target = $region156
      $region155: #{backbone_forward.1} parent=5 // pred_region
        %s2086 = ssub.s32 %s28, 2
        // Predicated region
        $region157: #{backbone_forward.1} parent=155 // pred_check
          %p2087 = pneg %p376
        $region158: #{backbone_forward.1} parent=155 // pred_check_branch
          %2089 = sbr.rel (%p2087) target = $region160
        $region159: #{backbone_forward.1} parent=155 // pred_region
          %s2090 = sand.u32 %s361, 1
          %s2091 = scalar_lea.sflag [#allocation8], %s2090
          %s2092 = sand.u32 %s361, 1
          %s2093 = smul.addr %s2092, 8
          %s2094 = scalar_lea.vmem [#allocation20], %s2093
          %2095 = dma.done %s2091, 128
        $region160: #{backbone_forward.1} parent=155 // pred_fallthru
          _
      $region156: #{backbone_forward.1} parent=5 // pred_fallthru
        _
    $region6: #{backbone_forward.1} parent=1 // loop_footer
      %s32 = sadd.s32 1, %s28
    $region7: #{backbone_forward.1} parent=1 // loop_footer_branch
      %27 = sbr.rel target = $region3
    $region8: #{backbone_forward.1} parent=1 // loop_exit
      _
    %2096 = vsyncpa [#allocation7], 1
    %s2097 = scalar_lea.sflag [#allocation7], 1
    %2098 = vsyncpa %s2097, 1
    %2099 = vsyncpa [#allocation10], 1
    %2100 = vsyncpa [#allocation13], 1
    %2101 = vsyncpa [#allocation16], 1
    %2102 = vsyncpa [#allocation19], 1
    %2103 = vsyncpa [#allocation8], 1
    %s2104 = scalar_lea.sflag [#allocation8], 1
    %2105 = vsyncpa %s2104, 1

</llo_original>
